<compile_context>
chip_gen: v7x
topology: tpu7x:2x2x1
jax: 0.10.0
libtpu: 0.0.40
codegen_flags: <defaults>
</compile_context>

<pallas_src>
import functools

import jax
import jax.numpy as jnp
from jax import lax
from jax.experimental import pallas as pl
from jax.experimental.pallas import tpu as pltpu

_MASK_VALUE = -1e30  # large finite negative: exp() underflows to 0, never produces NaN


def _round_up(n, m):
    return ((n + m - 1) // m) * m


def _fused_causal_attn_kernel(x_ref, w_ref, b_ref, o_ref, k_scr, v_scr, *, tile, hd_p):
    # x_ref: (tile, ED_p)   w_ref: (ED_p, 3*HD_p)   b_ref: (1, 3*HD_p)
    # o_ref: (tile, HD_p)   k_scr/v_scr: (CD_p, HD_p) bf16, persistent across the q axis.
    i = pl.program_id(1)
    row0 = pl.multiple_of(i * tile, tile)

    # ---- fused lane-dense QKV projection: q for this tile, k/v for kv-chunk i ----------
    qkv = jnp.dot(x_ref[...], w_ref[...],
                  preferred_element_type=jnp.float32) + b_ref[...]
    q = qkv[:, :hd_p].astype(jnp.bfloat16)              # already pre-scaled by 1/sqrt(HD)
    k_scr[pl.ds(row0, tile), :] = qkv[:, hd_p:2 * hd_p].astype(jnp.bfloat16)
    v_scr[pl.ds(row0, tile), :] = qkv[:, 2 * hd_p:].astype(jnp.bfloat16)

    def kv_step(j, carry, apply_mask):
        m_p, l_p, acc_p = carry
        col0 = pl.multiple_of(j * tile, tile)
        k = k_scr[pl.ds(col0, tile), :]
        v = v_scr[pl.ds(col0, tile), :]
        # Trans-B score matmul (contract last dims, no XLU transpose); bf16 in, f32 out.
        s = lax.dot_general(q, k, dimension_numbers=(((1,), (1,)), ((), ())),
                            preferred_element_type=jnp.float32)          # (tile, tile)
        if apply_mask:  # only the diagonal chunk pays for the iota mask
            row = row0 + lax.broadcasted_iota(jnp.int32, s.shape, 0)
            col = col0 + lax.broadcasted_iota(jnp.int32, s.shape, 1)
            s = jnp.where(col > row, _MASK_VALUE, s)
        m_n = jnp.maximum(m_p, jnp.max(s, axis=-1, keepdims=True))
        alpha = jnp.exp(m_p - m_n)
        p = jnp.exp(s - m_n)
        l_n = alpha * l_p + jnp.sum(p, axis=-1, keepdims=True)
        acc_n = alpha * acc_p + jnp.dot(p.astype(jnp.bfloat16), v,
                                        preferred_element_type=jnp.float32)
        return m_n, l_n, acc_n

    carry0 = (jnp.full((tile, 1), -jnp.inf, jnp.float32),     # running max
              jnp.zeros((tile, 1), jnp.float32),              # running denom
              jnp.zeros((tile, hd_p), jnp.float32))           # running PV accumulator

    # kv chunks strictly below the causal diagonal: no mask work (causal FLOP skip).
    carry = lax.fori_loop(0, i, lambda j, c: kv_step(j, c, False), carry0)
    # diagonal chunk: causal iota mask (also masks any padded kv rows for real queries).
    _, l, acc = kv_step(i, carry, True)

    # TODO(synk): attention-weight dropout (nn.Dropout) is training-only; identity in eval.
    o_ref[...] = (acc * pl.reciprocal(l, approx=False)).astype(o_ref.dtype)


def causal_self_attention_sh(x, w_q, w_k, w_v, b_q, b_k, b_v, *, tile=None):
    """x: [B, CD, ED]; w_*: [ED, HD] (pre-transposed nn.Linear weight); b_*: [1, HD] or [HD].

    Returns y: [B, CD, HD] matching CausalSelfAttentionSH.forward in eval mode.
    """
    B, CD, ED = x.shape
    HD = w_q.shape[1]
    out_dtype = x.dtype

    # ---- layout prep (trace time): lane-dense padding + fused pre-scaled QKV params ----
    ED_p = _round_up(ED, 128)
    HD_p = _round_up(HD, 128)
    if tile is None:
        tile = min(512, _round_up(CD, 128))       # f32 score tile (tile, tile) <= 1 MiB
    tile = max(128, _round_up(tile, 128))
    CD_p = _round_up(CD, tile)
    n_q = CD_p // tile

    scale = 1.0 / (HD ** 0.5)                      # folded into Q weights/bias: no VPU rescale
    w_qkv = jnp.zeros((ED_p, 3 * HD_p), jnp.float32)
    w_qkv = w_qkv.at[:ED, 0 * HD_p:0 * HD_p + HD].set(w_q.astype(jnp.float32) * scale)
    w_qkv = w_qkv.at[:ED, 1 * HD_p:1 * HD_p + HD].set(w_k.astype(jnp.float32))
    w_qkv = w_qkv.at[:ED, 2 * HD_p:2 * HD_p + HD].set(w_v.astype(jnp.float32))
    b_qkv = jnp.zeros((1, 3 * HD_p), jnp.float32)
    b_qkv = b_qkv.at[:, 0 * HD_p:0 * HD_p + HD].set(b_q.reshape(1, HD).astype(jnp.float32) * scale)
    b_qkv = b_qkv.at[:, 1 * HD_p:1 * HD_p + HD].set(b_k.reshape(1, HD).astype(jnp.float32))
    b_qkv = b_qkv.at[:, 2 * HD_p:2 * HD_p + HD].set(b_v.reshape(1, HD).astype(jnp.float32))

    x_p = jnp.pad(x.astype(jnp.float32), ((0, 0), (0, CD_p - CD), (0, ED_p - ED)))

    # ---- explicit VMEM budget (default scoped limit is only 16/32 MiB < physical) -------
    vmem_needed = (2 * CD_p * HD_p * 2            # resident per-batch K/V scratch (bf16)
                   + 2 * tile * ED_p * 4          # x tile (double-buffered)
                   + 2 * tile * HD_p * 4          # out tile (double-buffered)
                   + 2 * ED_p * 3 * HD_p * 4      # fused weights
                   + 6 * tile * tile * 4)         # score / p / mask intermediates headroom
    vmem_limit = int(min(max(vmem_needed + (8 << 20), 32 << 20), 96 << 20))
    # TODO(synk): for CD so large that bf16 K/V scratch alone exceeds VMEM (v7x: 64 MiB/TC),
    # page K/V chunks through HBM with manual double-buffered DMA instead of VMEM residency.

    out_p = pl.pallas_call(
        functools.partial(_fused_causal_attn_kernel, tile=tile, hd_p=HD_p),
        out_shape=jax.ShapeDtypeStruct((B, CD_p, HD_p), jnp.float32),
        grid_spec=pltpu.PrefetchScalarGridSpec(
            num_scalar_prefetch=0,
            grid=(B, n_q),
            in_specs=[
                pl.BlockSpec((None, tile, ED_p), lambda b, i: (b, i, 0)),   # x tile
                pl.BlockSpec((ED_p, 3 * HD_p), lambda b, i: (0, 0)),        # fused W_qkv
                pl.BlockSpec((1, 3 * HD_p), lambda b, i: (0, 0)),           # fused b_qkv
            ],
            out_specs=pl.BlockSpec((None, tile, HD_p), lambda b, i: (b, i, 0)),
            scratch_shapes=[
                pltpu.VMEM((CD_p, HD_p), jnp.bfloat16),                     # K (per batch)
                pltpu.VMEM((CD_p, HD_p), jnp.bfloat16),                     # V (per batch)
            ],
        ),
        # Batch leads and is "parallel" (v7x megacore sharding); the q-tile axis must be
        # "arbitrary" because the kv-chunk scratch is carried across it.
        # TODO(synk): if B == 1 on v7x, split the q axis across the two cores explicitly.
        compiler_params=pltpu.CompilerParams(
            dimension_semantics=("parallel", "arbitrary"),
            vmem_limit_bytes=vmem_limit),
    )(x_p, w_qkv, b_qkv)

    return out_p[:, :CD, :HD].astype(out_dtype)


def _reference(x, w_q, w_k, w_v, b_q, b_k, b_v):
    """Pure-JAX reference mirroring the PyTorch forward (eval mode)."""
    q = x @ w_q + b_q.reshape(1, -1)
    k = x @ w_k + b_k.reshape(1, -1)
    v = x @ w_v + b_v.reshape(1, -1)
    a = jnp.einsum("bqd,bkd->bqk", q, k)
    cd = x.shape[1]
    mask = jnp.triu(jnp.ones((cd, cd), dtype=bool), k=1)
    a = jnp.where(mask[None], -jnp.inf, a)
    a = jax.nn.softmax(a / (q.shape[-1] ** 0.5), axis=-1)
    return a @ v


if __name__ == "__main__":
    def run_case(key, B, CD, ED, HD, tile=None):
        kx, kwq, kwk, kwv, kbq, kbk, kbv = jax.random.split(key, 7)
        x = jax.random.normal(kx, (B, CD, ED), dtype=jnp.float32)
        # Deterministic synthetic params (shapes match nn.Linear(ED, HD), pre-transposed).
        w_q = jax.random.normal(kwq, (ED, HD), dtype=jnp.float32) * 0.05
        w_k = jax.random.normal(kwk, (ED, HD), dtype=jnp.float32) * 0.05
        w_v = jax.random.normal(kwv, (ED, HD), dtype=jnp.float32) * 0.05
        b_q = jax.random.normal(kbq, (1, HD), dtype=jnp.float32) * 0.01
        b_k = jax.random.normal(kbk, (1, HD), dtype=jnp.float32) * 0.01
        b_v = jax.random.normal(kbv, (1, HD), dtype=jnp.float32) * 0.01

        y = jax.block_until_ready(
            causal_self_attention_sh(x, w_q, w_k, w_v, b_q, b_k, b_v, tile=tile))
        y_ref = _reference(x, w_q, w_k, w_v, b_q, b_k, b_v)
        assert y.shape == (B, CD, HD)
        # Tolerance covers bf16 MXU inputs (with f32 accumulation) in the attention matmuls.
        err = jnp.max(jnp.abs(y - y_ref))
        assert jnp.allclose(y, y_ref, atol=1e-2, rtol=1e-2), f"mismatch vs ref, max err {err}"

    key = jax.random.PRNGKey(0)
    k1, k2 = jax.random.split(key)
    # Module's small default-ish shape: batch=2, context_length=8, att_dim=32, head_dim=16.
    run_case(k1, B=2, CD=8, ED=32, HD=16)
    # Non-divisible CD with multiple kv chunks: exercises padding, the causal-skip
    # fori_loop over below-diagonal chunks, and the diagonal-mask path (300 -> 3 tiles of 128).
    run_case(k2, B=1, CD=300, ED=48, HD=80, tile=128)

    print("KERNEL_OK")
</pallas_src>

<mosaic_0001>
module attributes {stable_mosaic.version = 11 : i64} {
  func.func @_fused_causal_attn_kernel(%arg0: i32, %arg1: i32, %arg2: memref<1x128x128xf32, #tpu.memory_space<vmem>>, %arg3: memref<128x384xf32, #tpu.memory_space<vmem>>, %arg4: memref<1x384xf32, #tpu.memory_space<vmem>>, %arg5: memref<1x128x128xf32, #tpu.memory_space<vmem>>, %arg6: memref<128x128xbf16, #tpu.memory_space<vmem>>, %arg7: memref<128x128xbf16, #tpu.memory_space<vmem>>) attributes {dimension_semantics = [#tpu.dimension_semantics<parallel>, #tpu.dimension_semantics<arbitrary>], iteration_bounds = array<i64: 2, 1>, scalar_prefetch = 0 : i64, scratch_operands = 2 : i64, tpu.core_type = #tpu.core_type<tc>, window_params = [{transform_indices = @transform_0, window_bounds = array<i64: 1, 128, 128>}, {pipeline_mode = #tpu.pipeline_mode<synchronous>, transform_indices = @transform_1, window_bounds = array<i64: 128, 384>}, {pipeline_mode = #tpu.pipeline_mode<synchronous>, transform_indices = @transform_2, window_bounds = array<i64: 1, 384>}, {transform_indices = @transform_3, window_bounds = array<i64: 1, 128, 128>}]} {
    %c128_i32 = arith.constant 128 : i32
    %0 = arith.muli %arg1, %c128_i32 : i32
    %1 = tpu.assume_multiple %0, 128 : i32
    %c0 = arith.constant 0 : index
    %c0_0 = arith.constant 0 : index
    %c0_1 = arith.constant 0 : index
    %2 = vector.load %arg2[%c0, %c0_0, %c0_1] : memref<1x128x128xf32, #tpu.memory_space<vmem>>, vector<1x128x128xf32>
    %3 = vector.shape_cast %2 : vector<1x128x128xf32> to vector<128x128xf32>
    %c0_2 = arith.constant 0 : index
    %c0_3 = arith.constant 0 : index
    %4 = vector.load %arg3[%c0_2, %c0_3] : memref<128x384xf32, #tpu.memory_space<vmem>>, vector<128x384xf32>
    %cst = arith.constant dense<0.000000e+00> : vector<128x384xf32>
    %5 = tpu.matmul %3, %4, %cst {dimension_numbers = #tpu.dot_dimension_numbers<[1], [0], [0], [1], [0, 0, 1, 1], [], []>} : vector<128x128xf32>, vector<128x384xf32>, vector<128x384xf32> -> vector<128x384xf32>
    %c0_4 = arith.constant 0 : index
    %c0_5 = arith.constant 0 : index
    %6 = vector.load %arg4[%c0_4, %c0_5] : memref<1x384xf32, #tpu.memory_space<vmem>>, vector<1x384xf32>
    %7 = vector.broadcast %6 : vector<1x384xf32> to vector<128x384xf32>
    %8 = arith.addf %5, %7 : vector<128x384xf32>
    %9 = vector.extract_strided_slice %8 {offsets = [0, 0], sizes = [128, 128], strides = [1, 1]} : vector<128x384xf32> to vector<128x128xf32>
    %10 = arith.truncf %9 : vector<128x128xf32> to vector<128x128xbf16>
    %11 = vector.extract_strided_slice %8 {offsets = [0, 128], sizes = [128, 128], strides = [1, 1]} : vector<128x384xf32> to vector<128x128xf32>
    %12 = arith.truncf %11 : vector<128x128xf32> to vector<128x128xbf16>
    %13 = arith.index_cast %1 : i32 to index
    %c0_6 = arith.constant 0 : index
    %14 = vector.load %arg6[%13, %c0_6] : memref<128x128xbf16, #tpu.memory_space<vmem>>, vector<128x128xbf16>
    tpu.vector_store %arg6[%13, %c0_6], %12 {strides = array<i32>} : memref<128x128xbf16, #tpu.memory_space<vmem>>, vector<128x128xbf16>,
    %15 = vector.extract_strided_slice %8 {offsets = [0, 256], sizes = [128, 128], strides = [1, 1]} : vector<128x384xf32> to vector<128x128xf32>
    %16 = arith.truncf %15 : vector<128x128xf32> to vector<128x128xbf16>
    %17 = arith.index_cast %1 : i32 to index
    %c0_7 = arith.constant 0 : index
    %18 = vector.load %arg7[%17, %c0_7] : memref<128x128xbf16, #tpu.memory_space<vmem>>, vector<128x128xbf16>
    tpu.vector_store %arg7[%17, %c0_7], %16 {strides = array<i32>} : memref<128x128xbf16, #tpu.memory_space<vmem>>, vector<128x128xbf16>,
    %cst_8 = arith.constant 0xFF800000 : f32
    %19 = vector.broadcast %cst_8 : f32 to vector<128x1xf32>
    %cst_9 = arith.constant 0.000000e+00 : f32
    %20 = vector.broadcast %cst_9 : f32 to vector<128x1xf32>
    %cst_10 = arith.constant 0.000000e+00 : f32
    %21 = vector.broadcast %cst_10 : f32 to vector<128x128xf32>
    %c0_i32 = arith.constant 0 : i32
    %22 = arith.subi %arg1, %c0_i32 : i32
    %23 = arith.addi %c0_i32, %22 : i32
    %c1_i32 = arith.constant 1 : i32
    %24:3 = scf.for %arg8 = %c0_i32 to %23 step %c1_i32 iter_args(%arg9 = %19, %arg10 = %20, %arg11 = %21) -> (vector<128x1xf32>, vector<128x1xf32>, vector<128x128xf32>)  : i32 {
      %c128_i32_22 = arith.constant 128 : i32
      %64 = arith.muli %arg8, %c128_i32_22 : i32
      %65 = tpu.assume_multiple %64, 128 : i32
      %66 = arith.index_cast %65 : i32 to index
      %c0_23 = arith.constant 0 : index
      %67 = vector.load %arg6[%66, %c0_23] : memref<128x128xbf16, #tpu.memory_space<vmem>>, vector<128x128xbf16>
      %68 = arith.index_cast %65 : i32 to index
      %c0_24 = arith.constant 0 : index
      %69 = vector.load %arg7[%68, %c0_24] : memref<128x128xbf16, #tpu.memory_space<vmem>>, vector<128x128xbf16>
      %cst_25 = arith.constant dense<0.000000e+00> : vector<128x128xf32>
      %70 = tpu.matmul %10, %67, %cst_25 {dimension_numbers = #tpu.dot_dimension_numbers<[1], [1], [0], [0], [0, 0, 1, 0], [], []>} : vector<128x128xbf16>, vector<128x128xbf16>, vector<128x128xf32> -> vector<128x128xf32>
      %cst_26 = arith.constant dense<0xFF800000> : vector<128xf32>
      %71 = vector.multi_reduction <maximumf>, %70, %cst_26 [1] : vector<128x128xf32> to vector<128xf32>
      %72 = vector.shape_cast %71 : vector<128xf32> to vector<128x1xf32>
      %73 = arith.maximumf %arg9, %72 : vector<128x1xf32>
      %74 = arith.subf %arg9, %73 : vector<128x1xf32>
      %75 = math.exp %74 : vector<128x1xf32>
      %76 = vector.broadcast %73 : vector<128x1xf32> to vector<128x128xf32>
      %77 = arith.subf %70, %76 : vector<128x128xf32>
      %78 = math.exp %77 : vector<128x128xf32>
      %79 = arith.mulf %75, %arg10 : vector<128x1xf32>
      %cst_27 = arith.constant dense<0.000000e+00> : vector<128xf32>
      %80 = vector.multi_reduction <add>, %78, %cst_27 [1] : vector<128x128xf32> to vector<128xf32>
      %81 = vector.shape_cast %80 : vector<128xf32> to vector<128x1xf32>
      %82 = arith.addf %79, %81 : vector<128x1xf32>
      %83 = vector.broadcast %75 : vector<128x1xf32> to vector<128x128xf32>
      %84 = arith.mulf %83, %arg11 : vector<128x128xf32>
      %85 = arith.truncf %78 : vector<128x128xf32> to vector<128x128xbf16>
      %cst_28 = arith.constant dense<0.000000e+00> : vector<128x128xf32>
      %86 = tpu.matmul %85, %69, %cst_28 {dimension_numbers = #tpu.dot_dimension_numbers<[1], [0], [0], [1], [0, 0, 1, 1], [], []>} : vector<128x128xbf16>, vector<128x128xbf16>, vector<128x128xf32> -> vector<128x128xf32>
      %87 = arith.addf %84, %86 : vector<128x128xf32>
      scf.yield %73, %82, %87 : vector<128x1xf32>, vector<128x1xf32>, vector<128x128xf32>
    }
    %c128_i32_11 = arith.constant 128 : i32
    %25 = arith.muli %arg1, %c128_i32_11 : i32
    %26 = tpu.assume_multiple %25, 128 : i32
    %27 = arith.index_cast %26 : i32 to index
    %c0_12 = arith.constant 0 : index
    %28 = vector.load %arg6[%27, %c0_12] : memref<128x128xbf16, #tpu.memory_space<vmem>>, vector<128x128xbf16>
    %29 = arith.index_cast %26 : i32 to index
    %c0_13 = arith.constant 0 : index
    %30 = vector.load %arg7[%29, %c0_13] : memref<128x128xbf16, #tpu.memory_space<vmem>>, vector<128x128xbf16>
    %cst_14 = arith.constant dense<0.000000e+00> : vector<128x128xf32>
    %31 = tpu.matmul %10, %28, %cst_14 {dimension_numbers = #tpu.dot_dimension_numbers<[1], [1], [0], [0], [0, 0, 1, 0], [], []>} : vector<128x128xbf16>, vector<128x128xbf16>, vector<128x128xf32> -> vector<128x128xf32>
    %32 = tpu.iota {dimensions = array<i32: 0>} : vector<128x128xi32>
    %33 = vector.broadcast %1 : i32 to vector<128x128xi32>
    %34 = arith.addi %33, %32 : vector<128x128xi32>
    %35 = tpu.iota {dimensions = array<i32: 1>} : vector<128x128xi32>
    %36 = vector.broadcast %26 : i32 to vector<128x128xi32>
    %37 = arith.addi %36, %35 : vector<128x128xi32>
    %38 = arith.cmpi sgt, %37, %34 : vector<128x128xi32>
    %cst_15 = arith.constant -1.000000e+30 : f32
    %39 = vector.broadcast %cst_15 : f32 to vector<128x128xf32>
    %40 = arith.select %38, %39, %31 : vector<128x128xi1>, vector<128x128xf32>
    %cst_16 = arith.constant dense<0xFF800000> : vector<128xf32>
    %41 = vector.multi_reduction <maximumf>, %40, %cst_16 [1] : vector<128x128xf32> to vector<128xf32>
    %42 = vector.shape_cast %41 : vector<128xf32> to vector<128x1xf32>
    %43 = arith.maximumf %24#0, %42 : vector<128x1xf32>
    %44 = arith.subf %24#0, %43 : vector<128x1xf32>
    %45 = math.exp %44 : vector<128x1xf32>
    %46 = vector.broadcast %43 : vector<128x1xf32> to vector<128x128xf32>
    %47 = arith.subf %40, %46 : vector<128x128xf32>
    %48 = math.exp %47 : vector<128x128xf32>
    %49 = arith.mulf %45, %24#1 : vector<128x1xf32>
    %cst_17 = arith.constant dense<0.000000e+00> : vector<128xf32>
    %50 = vector.multi_reduction <add>, %48, %cst_17 [1] : vector<128x128xf32> to vector<128xf32>
    %51 = vector.shape_cast %50 : vector<128xf32> to vector<128x1xf32>
    %52 = arith.addf %49, %51 : vector<128x1xf32>
    %53 = vector.broadcast %45 : vector<128x1xf32> to vector<128x128xf32>
    %54 = arith.mulf %53, %24#2 : vector<128x128xf32>
    %55 = arith.truncf %48 : vector<128x128xf32> to vector<128x128xbf16>
    %cst_18 = arith.constant dense<0.000000e+00> : vector<128x128xf32>
    %56 = tpu.matmul %55, %30, %cst_18 {dimension_numbers = #tpu.dot_dimension_numbers<[1], [0], [0], [1], [0, 0, 1, 1], [], []>} : vector<128x128xbf16>, vector<128x128xbf16>, vector<128x128xf32> -> vector<128x128xf32>
    %57 = arith.addf %54, %56 : vector<128x128xf32>
    %58 = tpu.reciprocal %52 : vector<128x1xf32> -> vector<128x1xf32>
    %59 = vector.broadcast %58 : vector<128x1xf32> to vector<128x128xf32>
    %60 = arith.mulf %57, %59 : vector<128x128xf32>
    %c0_19 = arith.constant 0 : index
    %c0_20 = arith.constant 0 : index
    %c0_21 = arith.constant 0 : index
    %61 = vector.load %arg5[%c0_19, %c0_20, %c0_21] : memref<1x128x128xf32, #tpu.memory_space<vmem>>, vector<1x128x128xf32>
    %62 = vector.shape_cast %61 : vector<1x128x128xf32> to vector<128x128xf32>
    %63 = vector.shape_cast %60 : vector<128x128xf32> to vector<1x128x128xf32>
    tpu.vector_store %arg5[%c0_19, %c0_20, %c0_21], %63 {strides = array<i32>} : memref<1x128x128xf32, #tpu.memory_space<vmem>>, vector<1x128x128xf32>,
    return
  }
  func.func @transform_0(%arg0: i32, %arg1: i32) -> (i32, i32, i32) {
    %c0_i32 = arith.constant 0 : i32
    %c0_i32_0 = arith.constant 0 : i32
    return %arg0, %arg1, %c0_i32 : i32, i32, i32
  }
  func.func @transform_1(%arg0: i32, %arg1: i32) -> (i32, i32) {
    %c0_i32 = arith.constant 0 : i32
    %c0_i32_0 = arith.constant 0 : i32
    %c0_i32_1 = arith.constant 0 : i32
    return %c0_i32, %c0_i32_0 : i32, i32
  }
  func.func @transform_2(%arg0: i32, %arg1: i32) -> (i32, i32) {
    %c0_i32 = arith.constant 0 : i32
    %c0_i32_0 = arith.constant 0 : i32
    %c0_i32_1 = arith.constant 0 : i32
    return %c0_i32, %c0_i32_0 : i32, i32
  }
  func.func @transform_3(%arg0: i32, %arg1: i32) -> (i32, i32, i32) {
    %c0_i32 = arith.constant 0 : i32
    %c0_i32_0 = arith.constant 0 : i32
    return %arg0, %arg1, %c0_i32 : i32, i32, i32
  }
}

</mosaic_0001>

<llo_original>
// kernel: tpu_custom_call.1
$region0: #{tpu_custom_call.1}
  #allocation0 [shape = 'u32[]', space=smem, size = 0x4, offset = 0x4, fixed_abs, tag = 'smem constant byte address 0x4 - core index']
  #allocation1 [shape = 'u32[144,128]{1,0:T(1,128)}', space=vmem, size = 0x12000, scoped, tag = 'internal scratch']
  #allocation2 [shape = 'bf16[128,128]{1,0:T(16,128)(2,1)}', space=vmem, size = 0x8000, scoped, tag = 'scratch operand']
  #allocation3 [shape = 'bf16[128,128]{1,0:T(16,128)(2,1)}', space=vmem, size = 0x8000, scoped, tag = 'scratch operand']
  %s0 = inlined_call_operand.hbm [shape: f32[2,128,128], index: 0, kind: input, shape index: {}]
  %s1 = inlined_call_operand.hbm [shape: f32[128,384], index: 1, kind: input, shape index: {}]
  %s2 = inlined_call_operand.vmem [shape: f32[1,384], index: 2, kind: input, shape index: {}]
  %s3 = inlined_call_operand.hbm [shape: f32[2,128,128], index: 3, kind: output, shape index: {}]
  %s4 = sld [smem:[#allocation0]]
  $region60: #{tpu_custom_call.1} parent=0
    _
  %s6 = ssub.s32 1, %s4
  %s7 = scalar_select 0, %s6, %s4
  $region1: #{tpu_custom_call.1} parent=0
    #allocation4 [shape = 'u8[131072]{0}', space=vmem, size = 0x20000, scoped, tag = 'input window, operand 0']
    #allocation5 [shape = 's32[2]{0}', space=sflag, size = 0x8, scoped, tag = 'scoped memory for tpu_custom_call.1']
    #allocation6 [shape = 's32[2]{0}', space=sflag, size = 0x8, scoped, tag = 'scoped memory for tpu_custom_call.1']
    #allocation7 [shape = 'u8[196608]{0}', space=vmem, size = 0x30000, scoped, tag = 'input window, operand 1, single buffered']
    #allocation8 [shape = 's32[1]{0}', space=sflag, size = 0x4, scoped, tag = 'scoped memory for tpu_custom_call.1']
    #allocation9 [shape = 'u8[131072]{0}', space=vmem, size = 0x20000, scoped, tag = 'output window, operand 0']
    %8 = vsyncpa [#allocation5], 0
    %s9 = scalar_lea.sflag [#allocation5], 1
    %10 = vsyncpa %s9, 0
    %11 = vsyncpa [#allocation8], 0
    %12 = vsyncpa [#allocation6], 0
    %s13 = scalar_lea.sflag [#allocation6], 1
    %14 = vsyncpa %s13, 0
    loop: start=0, step=1, limit=4
    $region2: #{tpu_custom_call.1} parent=1 // loop_pre_header
      _
    $region3: #{tpu_custom_call.1} parent=1 // loop_header
      %s16 = sphi 0, %s20
      %p17 = scmp.ge.s32.totalorder %s16, 4
      %s23 = sphi 0, %s35
      %s24 = sphi 0, %s31
      %s25 = sphi 0, %s23
      %s26 = sphi 0, %s24
      %s27 = sphi 0, %s25
      %s28 = sphi 0, %s26
      %s40 = sphi 0, %s42
      %s43 = sphi 0, %s40
      %s44 = sphi 0, %s43
      %s60 = sphi 0, %s44
      %s64 = sphi 0, %s64
      %s66 = sphi 0, %s64
      %s67 = sphi 0, %s66
      %s81 = sphi 0, %s67
      %s85 = sphi 0, %s85
      %s87 = sphi 0, %s85
      %s88 = sphi 0, %s87
      %s102 = sphi 0, %s88
      %s110 = sphi 0, %s112
      %s113 = sphi 0, %s110
      %s114 = sphi 0, %s113
      %s130 = sphi 0, %s114
    $region4: #{tpu_custom_call.1} parent=1 // loop_header_branch
      %19 = sbr.rel (%p17) target = $region8
    $region5: #{tpu_custom_call.1} parent=1 // loop_body
      %s21 = ssub.s32 %s16, 1
      %s22 = ssub.s32 %s16, 2
      %s29 = sadd.s32 1, %s24
      %p30 = scmp.ge.s32.totalorder %s29, 1
      %s31 = scalar_select %p30, 0, %s29
      %s32 = sadd.s32 1, %s23
      %s33 = scalar_select %p30, %s32, %s23
      %p34 = scmp.ge.s32.totalorder %s33, 2
      %s35 = scalar_select %p34, 0, %s33
      %s36 = ssub.s32 %s23, %s35
      %s37 = ssub.s32 %s24, %s31
      %s38 = sor.u32 %s36, %s37
      %p39 = scmp.eq.s32.totalorder %s38, 0
      %s41 = sadd.s32 %s40, 1
      %s42 = scalar_select %p39, %s40, %s41
      %p45 = pneg %p39
      %p46 = scmp.eq.s32.totalorder %s16, 1
      %p47 = por %p45, %p46
      %p48 = scmp.ne.s32.totalorder %s40, %s43
      %p49 = scmp.eq.s32.totalorder %s16, 0
      %p50 = por %p48, %p49
      %p51 = scmp.ne.s32.totalorder %s40, %s43
      %p52 = scmp.eq.s32.totalorder %s21, 1
      %p53 = por %p51, %p52
      %p54 = scmp.ne.s32.totalorder %s43, %s44
      %p55 = scmp.eq.s32.totalorder %s21, 0
      %p56 = por %p54, %p55
      %p57 = scmp.ne.s32.totalorder %s43, %s44
      %p58 = scmp.eq.s32.totalorder %s22, 1
      %p59 = por %p57, %p58
      %p61 = scmp.ne.s32.totalorder %s44, %s60
      %p62 = scmp.eq.s32.totalorder %s22, 0
      %p63 = por %p61, %p62
      %s65 = sadd.s32 %s64, 1
      %p68 = scmp.eq.s32.totalorder %s16, 1
      %p69 = scmp.ne.s32.totalorder %s64, %s66
      %p70 = scmp.eq.s32.totalorder %s16, 0
      %p71 = por %p69, %p70
      %p72 = scmp.ne.s32.totalorder %s64, %s66
      %p73 = scmp.eq.s32.totalorder %s21, 1
      %p74 = por %p72, %p73
      %p75 = scmp.ne.s32.totalorder %s66, %s67
      %p76 = scmp.eq.s32.totalorder %s21, 0
      %p77 = por %p75, %p76
      %p78 = scmp.ne.s32.totalorder %s66, %s67
      %p79 = scmp.eq.s32.totalorder %s22, 1
      %p80 = por %p78, %p79
      %p82 = scmp.ne.s32.totalorder %s67, %s81
      %p83 = scmp.eq.s32.totalorder %s22, 0
      %p84 = por %p82, %p83
      %s86 = sadd.s32 %s85, 1
      %p89 = scmp.eq.s32.totalorder %s16, 1
      %p90 = scmp.ne.s32.totalorder %s85, %s87
      %p91 = scmp.eq.s32.totalorder %s16, 0
      %p92 = por %p90, %p91
      %p93 = scmp.ne.s32.totalorder %s85, %s87
      %p94 = scmp.eq.s32.totalorder %s21, 1
      %p95 = por %p93, %p94
      %p96 = scmp.ne.s32.totalorder %s87, %s88
      %p97 = scmp.eq.s32.totalorder %s21, 0
      %p98 = por %p96, %p97
      %p99 = scmp.ne.s32.totalorder %s87, %s88
      %p100 = scmp.eq.s32.totalorder %s22, 1
      %p101 = por %p99, %p100
      %p103 = scmp.ne.s32.totalorder %s88, %s102
      %p104 = scmp.eq.s32.totalorder %s22, 0
      %p105 = por %p103, %p104
      %s106 = ssub.s32 %s23, %s35
      %s107 = ssub.s32 %s24, %s31
      %s108 = sor.u32 %s106, %s107
      %p109 = scmp.eq.s32.totalorder %s108, 0
      %s111 = sadd.s32 %s110, 1
      %s112 = scalar_select %p109, %s110, %s111
      %p115 = pneg %p109
      %p116 = scmp.eq.s32.totalorder %s16, 1
      %p117 = por %p115, %p116
      %p118 = scmp.ne.s32.totalorder %s110, %s113
      %p119 = scmp.eq.s32.totalorder %s16, 0
      %p120 = por %p118, %p119
      %p121 = scmp.ne.s32.totalorder %s110, %s113
      %p122 = scmp.eq.s32.totalorder %s21, 1
      %p123 = por %p121, %p122
      %p124 = scmp.ne.s32.totalorder %s113, %s114
      %p125 = scmp.eq.s32.totalorder %s21, 0
      %p126 = por %p124, %p125
      %p127 = scmp.ne.s32.totalorder %s113, %s114
      %p128 = scmp.eq.s32.totalorder %s22, 1
      %p129 = por %p127, %p128
      %p131 = scmp.ne.s32.totalorder %s114, %s130
      %p132 = scmp.eq.s32.totalorder %s22, 0
      %p133 = por %p131, %p132
      %p134 = scmp.le.s32.totalorder 1, %s16
      %p135 = scmp.lt.s32.totalorder %s16, 3
      %p136 = pnand %p134, %p135
      %p137 = pneg %p136
      // Predicated region
      $region9: #{tpu_custom_call.1} parent=5 // pred_check
        _
      $region10: #{tpu_custom_call.1} parent=5 // pred_check_branch
        %139 = sbr.rel (%p136) target = $region12
      $region11: #{tpu_custom_call.1} parent=5 // pred_region
        %s140 = ssub.s32 %s16, 1
        // Predicated region
        $region13: #{tpu_custom_call.1} parent=11 // pred_check
          %p141 = pneg %p77
        $region14: #{tpu_custom_call.1} parent=11 // pred_check_branch
          %143 = sbr.rel (%p141) target = $region16
        $region15: #{tpu_custom_call.1} parent=11 // pred_region
          %s145 = ssub.s32 6144, 6144
          %146 = vsyncadd [#allocation8], %s145
          %s147 = sshll.u32 [#allocation7], 4
          %s148 = int_to_ptr.vmem [resolvable:$true] %s147
          %153 = dma.hbm_to_vmem [thread:$0]  %s1, 6144, %s148, [#allocation8], 384, 384, 24
        $region16: #{tpu_custom_call.1} parent=11 // pred_fallthru
          _
        // Predicated region
        $region17: #{tpu_custom_call.1} parent=11 // pred_check
          %p154 = pneg %p98
        $region18: #{tpu_custom_call.1} parent=11 // pred_check_branch
          %156 = sbr.rel (%p154) target = $region20
        $region19: #{tpu_custom_call.1} parent=11 // pred_region
          _
        $region20: #{tpu_custom_call.1} parent=11 // pred_fallthru
          _
      $region12: #{tpu_custom_call.1} parent=5 // pred_fallthru
        _
      %p157 = scmp.lt.s32.totalorder %s16, 2
      // Predicated region
      $region21: #{tpu_custom_call.1} parent=5 // pred_check
        %p158 = pneg %p157
      $region22: #{tpu_custom_call.1} parent=5 // pred_check_branch
        %160 = sbr.rel (%p158) target = $region24
      $region23: #{tpu_custom_call.1} parent=5 // pred_region
        // Predicated region
        $region25: #{tpu_custom_call.1} parent=23 // pred_check
          %p161 = pneg %p50
        $region26: #{tpu_custom_call.1} parent=23 // pred_check_branch
          %163 = sbr.rel (%p161) target = $region28
        $region27: #{tpu_custom_call.1} parent=23 // pred_region
          %s164 = sand.u32 %s40, 1
          %s165 = scalar_lea.sflag [#allocation5], %s164
          %s166 = sand.u32 %s40, 1
          %s167 = smul.addr %s166, 128
          %s168 = scalar_lea.vmem [#allocation4], %s167
          %s169 = smul.u32 16, %s24
          %s171 = ssub.s32 2048, 2048
          %172 = vsyncadd %s165, %s171
          %s173 = smul.addr %s23, 16
          %s174 = sadd.s32 %s169, %s173
          %s175 = smul.addr %s174, 128
          %s176 = scalar_lea.hbm %s0, %s175
          %s177 = sshll.u32 %s168, 4
          %s178 = int_to_ptr.vmem [resolvable:$true] %s177
          %183 = dma.hbm_to_vmem [thread:$0]  %s176, 2048, %s178, %s165, 128, 128, 8
        $region28: #{tpu_custom_call.1} parent=23 // pred_fallthru
          _
      $region24: #{tpu_custom_call.1} parent=5 // pred_fallthru
        _
      %p184 = scmp.le.s32.totalorder 1, %s16
      %p185 = scmp.lt.s32.totalorder %s16, 3
      %p186 = pnand %p184, %p185
      %p187 = pneg %p186
      // Predicated region
      $region29: #{tpu_custom_call.1} parent=5 // pred_check
        _
      $region30: #{tpu_custom_call.1} parent=5 // pred_check_branch
        %189 = sbr.rel (%p186) target = $region32
      $region31: #{tpu_custom_call.1} parent=5 // pred_region
        %s190 = ssub.s32 %s16, 1
        %s191 = sand.u32 %s43, 1
        %s192 = scalar_lea.sflag [#allocation5], %s191
        %s193 = sand.u32 %s43, 1
        %s194 = smul.addr %s193, 128
        %s195 = scalar_lea.vmem [#allocation4], %s194
        // Predicated region
        $region33: #{tpu_custom_call.1} parent=31 // pred_check
          %p196 = pneg %p56
        $region34: #{tpu_custom_call.1} parent=31 // pred_check_branch
          %198 = sbr.rel (%p196) target = $region36
        $region35: #{tpu_custom_call.1} parent=31 // pred_region
          %199 = dma.done %s192, 2048
        $region36: #{tpu_custom_call.1} parent=31 // pred_fallthru
          _
        // Predicated region
        $region37: #{tpu_custom_call.1} parent=31 // pred_check
          %p200 = pneg %p77
        $region38: #{tpu_custom_call.1} parent=31 // pred_check_branch
          %202 = sbr.rel (%p200) target = $region40
        $region39: #{tpu_custom_call.1} parent=31 // pred_region
          %203 = dma.done [#allocation8], 6144
        $region40: #{tpu_custom_call.1} parent=31 // pred_fallthru
          _
        %s204 = sand.u32 %s43, 1
        %s205 = scalar_lea.sflag [#allocation5], %s204
        %s206 = sand.u32 %s43, 1
        %s207 = smul.addr %s206, 128
        %s208 = scalar_lea.vmem [#allocation4], %s207
        %p209 = pneg %p56
        %p210 = pneg %p53
        %p211 = pneg %p77
        %p212 = pneg %p74
        %p213 = pneg %p98
        %p214 = pneg %p95
        %p215 = pneg %p126
        %p216 = pneg %p123
        %s217 = sand.u32 %s113, 1
        %s218 = scalar_lea.sflag [#allocation6], %s217
        %s219 = sand.u32 %s113, 1
        %s220 = smul.addr %s219, 128
        %s221 = scalar_lea.vmem [#allocation9], %s220
        %s222 = smul.u32 16, %s26
        %s223 = smul.u32 16, %s26
        %s225 = smul.u32 %s26, 128
        %v226 = vld [vmem:[%s195] sm:$0xff]
        %v227 = vld [vmem:[%s195 + $0x8] sm:$0xff]
        %v228 = vld [vmem:[%s195 + $0x10] sm:$0xff]
        %v229 = vld [vmem:[%s195 + $0x18] sm:$0xff]
        %v230 = vld [vmem:[%s195 + $0x20] sm:$0xff]
        %v231 = vld [vmem:[%s195 + $0x28] sm:$0xff]
        %v232 = vld [vmem:[%s195 + $0x30] sm:$0xff]
        %v233 = vld [vmem:[%s195 + $0x38] sm:$0xff]
        %v234 = vld [vmem:[%s195 + $0x40] sm:$0xff]
        %v235 = vld [vmem:[%s195 + $0x48] sm:$0xff]
        %v236 = vld [vmem:[%s195 + $0x50] sm:$0xff]
        %v237 = vld [vmem:[%s195 + $0x58] sm:$0xff]
        %v238 = vld [vmem:[%s195 + $0x60] sm:$0xff]
        %v239 = vld [vmem:[%s195 + $0x68] sm:$0xff]
        %v240 = vld [vmem:[%s195 + $0x70] sm:$0xff]
        %v241 = vld [vmem:[%s195 + $0x78] sm:$0xff]
        %v242 = vld [vmem:[#allocation7] sm:$0xff]
        %v243 = vld [vmem:[#allocation7 + $0x8] sm:$0xff]
        %v244 = vld [vmem:[#allocation7 + $0x10] sm:$0xff]
        %v245 = vld [vmem:[#allocation7 + $0x18] sm:$0xff]
        %v246 = vld [vmem:[#allocation7 + $0x20] sm:$0xff]
        %v247 = vld [vmem:[#allocation7 + $0x28] sm:$0xff]
        %v248 = vld [vmem:[#allocation7 + $0x30] sm:$0xff]
        %v249 = vld [vmem:[#allocation7 + $0x38] sm:$0xff]
        %v250 = vld [vmem:[#allocation7 + $0x40] sm:$0xff]
        %v251 = vld [vmem:[#allocation7 + $0x48] sm:$0xff]
        %v252 = vld [vmem:[#allocation7 + $0x50] sm:$0xff]
        %v253 = vld [vmem:[#allocation7 + $0x58] sm:$0xff]
        %v254 = vld [vmem:[#allocation7 + $0x60] sm:$0xff]
        %v255 = vld [vmem:[#allocation7 + $0x68] sm:$0xff]
        %v256 = vld [vmem:[#allocation7 + $0x70] sm:$0xff]
        %v257 = vld [vmem:[#allocation7 + $0x78] sm:$0xff]
        %v258 = vld [vmem:[#allocation7 + $0x80] sm:$0xff]
        %v259 = vld [vmem:[#allocation7 + $0x88] sm:$0xff]
        %v260 = vld [vmem:[#allocation7 + $0x90] sm:$0xff]
        %v261 = vld [vmem:[#allocation7 + $0x98] sm:$0xff]
        %v262 = vld [vmem:[#allocation7 + $0xa0] sm:$0xff]
        %v263 = vld [vmem:[#allocation7 + $0xa8] sm:$0xff]
        %v264 = vld [vmem:[#allocation7 + $0xb0] sm:$0xff]
        %v265 = vld [vmem:[#allocation7 + $0xb8] sm:$0xff]
        %v266 = vld [vmem:[#allocation7 + $0xc0] sm:$0xff]
        %v267 = vld [vmem:[#allocation7 + $0xc8] sm:$0xff]
        %v268 = vld [vmem:[#allocation7 + $0xd0] sm:$0xff]
        %v269 = vld [vmem:[#allocation7 + $0xd8] sm:$0xff]
        %v270 = vld [vmem:[#allocation7 + $0xe0] sm:$0xff]
        %v271 = vld [vmem:[#allocation7 + $0xe8] sm:$0xff]
        %v272 = vld [vmem:[#allocation7 + $0xf0] sm:$0xff]
        %v273 = vld [vmem:[#allocation7 + $0xf8] sm:$0xff]
        %v274 = vld [vmem:[#allocation7 + $0x100] sm:$0xff]
        %v275 = vld [vmem:[#allocation7 + $0x108] sm:$0xff]
        %v276 = vld [vmem:[#allocation7 + $0x110] sm:$0xff]
        %v277 = vld [vmem:[#allocation7 + $0x118] sm:$0xff]
        %v278 = vld [vmem:[#allocation7 + $0x120] sm:$0xff]
        %v279 = vld [vmem:[#allocation7 + $0x128] sm:$0xff]
        %v280 = vld [vmem:[#allocation7 + $0x130] sm:$0xff]
        %v281 = vld [vmem:[#allocation7 + $0x138] sm:$0xff]
        %v282 = vld [vmem:[#allocation7 + $0x140] sm:$0xff]
        %v283 = vld [vmem:[#allocation7 + $0x148] sm:$0xff]
        %v284 = vld [vmem:[#allocation7 + $0x150] sm:$0xff]
        %v285 = vld [vmem:[#allocation7 + $0x158] sm:$0xff]
        %v286 = vld [vmem:[#allocation7 + $0x160] sm:$0xff]
        %v287 = vld [vmem:[#allocation7 + $0x168] sm:$0xff]
        %v288 = vld [vmem:[#allocation7 + $0x170] sm:$0xff]
        %v289 = vld [vmem:[#allocation7 + $0x178] sm:$0xff]
        %v290 = vld [vmem:[%s2] sm:$0x7]
        %v292 = vlaneseq
        %v293 = vshrl.u32 %v292, 7
        %v294 = vsub.s32 0, %v293
        %v295 = vrot.slane %v290, %v294
        %v296 = vlaneseq
        %v297 = vshrl.u32 %v296, 7
        %v298 = vsub.s32 1, %v297
        %v299 = vrot.slane %v290, %v298
        %v300 = vlaneseq
        %v301 = vshrl.u32 %v300, 7
        %v302 = vsub.s32 2, %v301
        %v303 = vrot.slane %v290, %v302
        %307 = vmatprep.subr.mxu0 %v243
        %308 = vmatpush1.msra.mxu0 %v242
        %309 = vmatprep.subr.mxu0 %v246
        %310 = vmatpush1.msra.mxu0 %v245
        %311 = vmatprep.subr.mxu0 %v249
        %312 = vmatpush1.msra.mxu0 %v248
        %313 = vmatprep.subr.mxu0 %v252
        %314 = vmatpush1.msra.mxu0 %v251
        %315 = vmatprep.subr.mxu0 %v255
        %316 = vmatpush1.msra.mxu0 %v254
        %317 = vmatprep.subr.mxu0 %v258
        %318 = vmatpush1.msra.mxu0 %v257
        %319 = vmatprep.subr.mxu0 %v261
        %320 = vmatpush1.msra.mxu0 %v260
        %321 = vmatprep.subr.mxu0 %v264
        %322 = vmatpush1.msra.mxu0 %v263
        %323 = vmatprep.subr.mxu0 %v267
        %324 = vmatpush1.msra.mxu0 %v266
        %325 = vmatprep.subr.mxu0 %v270
        %326 = vmatpush1.msra.mxu0 %v269
        %327 = vmatprep.subr.mxu0 %v273
        %328 = vmatpush1.msra.mxu0 %v272
        %329 = vmatprep.subr.mxu0 %v276
        %330 = vmatpush1.msra.mxu0 %v275
        %331 = vmatprep.subr.mxu0 %v279
        %332 = vmatpush1.msra.mxu0 %v278
        %333 = vmatprep.subr.mxu0 %v282
        %334 = vmatpush1.msra.mxu0 %v281
        %335 = vmatprep.subr.mxu0 %v285
        %336 = vmatpush1.msra.mxu0 %v284
        %337 = vmatprep.subr.mxu0 %v288
        %338 = vmatpush1.msra.mxu0 %v287
        %339 = vmatprep.subr.mxu0 0.0
        %340 = vmatpush1.msra.mxu0 0.0
        %341 = vmatprep.subr.mxu0 0.0
        %342 = vmatpush1.msra.mxu0 0.0
        %343 = vmatprep.subr.mxu0 0.0
        %344 = vmatpush1.msra.mxu0 0.0
        %345 = vmatprep.subr.mxu0 0.0
        %346 = vmatpush1.msra.mxu0 0.0
        %347 = vmatprep.subr.mxu0 0.0
        %348 = vmatpush1.msra.mxu0 0.0
        %349 = vmatprep.subr.mxu0 0.0
        %350 = vmatpush1.msra.mxu0 0.0
        %351 = vmatprep.subr.mxu0 0.0
        %352 = vmatpush1.msra.mxu0 0.0
        %353 = vmatprep.subr.mxu0 0.0
        %354 = vmatpush1.msra.mxu0 0.0
        %355 = vmatprep.subr.mxu0 0.0
        %356 = vmatpush1.msra.mxu0 0.0
        %357 = vmatprep.subr.mxu0 0.0
        %358 = vmatpush1.msra.mxu0 0.0
        %359 = vmatprep.subr.mxu0 0.0
        %360 = vmatpush1.msra.mxu0 0.0
        %361 = vmatprep.subr.mxu0 0.0
        %362 = vmatpush1.msra.mxu0 0.0
        %363 = vmatprep.subr.mxu0 0.0
        %364 = vmatpush1.msra.mxu0 0.0
        %365 = vmatprep.subr.mxu0 0.0
        %366 = vmatpush1.msra.mxu0 0.0
        %367 = vmatprep.subr.mxu0 0.0
        %368 = vmatpush1.msra.mxu0 0.0
        %369 = vmatprep.subr.mxu0 0.0
        %370 = vmatpush1.msra.mxu0 0.0
        %371 = vmatprep.mubr.f32.mxu0 0.0
        %372 = vmatmul.mubr.f32.gmra.mrb[0].mxu0 %v226
        %v373 = vpop.f32.mrb[0].mxu0
        %v374 = vadd.f32 %v295, %v373
        %v375 = vpop.f32.mrb[0].mxu0
        %v376 = vadd.f32 %v299, %v375
        %377 = vmatprep.mubr.f32.mxu0 0.0
        %378 = vmatmul.mubr.f32.gmra.mrb[0].mxu0 %v227
        %v379 = vpop.f32.mrb[0].mxu0
        %v380 = vadd.f32 %v295, %v379
        %v381 = vpop.f32.mrb[0].mxu0
        %v382 = vadd.f32 %v299, %v381
        %383 = vmatprep.mubr.f32.mxu0 0.0
        %384 = vmatmul.mubr.f32.gmra.mrb[0].mxu0 %v228
        %v385 = vpop.f32.mrb[0].mxu0
        %v386 = vadd.f32 %v295, %v385
        %v387 = vpop.f32.mrb[0].mxu0
        %v388 = vadd.f32 %v299, %v387
        %389 = vmatprep.mubr.f32.mxu0 0.0
        %390 = vmatmul.mubr.f32.gmra.mrb[0].mxu0 %v229
        %v391 = vpop.f32.mrb[0].mxu0
        %v392 = vadd.f32 %v295, %v391
        %v393 = vpop.f32.mrb[0].mxu0
        %v394 = vadd.f32 %v299, %v393
        %395 = vmatprep.mubr.f32.mxu0 0.0
        %396 = vmatmul.mubr.f32.gmra.mrb[0].mxu0 %v230
        %v397 = vpop.f32.mrb[0].mxu0
        %v398 = vadd.f32 %v295, %v397
        %v399 = vpop.f32.mrb[0].mxu0
        %v400 = vadd.f32 %v299, %v399
        %401 = vmatprep.mubr.f32.mxu0 0.0
        %402 = vmatmul.mubr.f32.gmra.mrb[0].mxu0 %v231
        %v403 = vpop.f32.mrb[0].mxu0
        %v404 = vadd.f32 %v295, %v403
        %v405 = vpop.f32.mrb[0].mxu0
        %v406 = vadd.f32 %v299, %v405
        %407 = vmatprep.mubr.f32.mxu0 0.0
        %408 = vmatmul.mubr.f32.gmra.mrb[0].mxu0 %v232
        %v409 = vpop.f32.mrb[0].mxu0
        %v410 = vadd.f32 %v295, %v409
        %v411 = vpop.f32.mrb[0].mxu0
        %v412 = vadd.f32 %v299, %v411
        %413 = vmatprep.mubr.f32.mxu0 0.0
        %414 = vmatmul.mubr.f32.gmra.mrb[0].mxu0 %v233
        %v415 = vpop.f32.mrb[0].mxu0
        %v416 = vadd.f32 %v295, %v415
        %v417 = vpop.f32.mrb[0].mxu0
        %v418 = vadd.f32 %v299, %v417
        %419 = vmatprep.mubr.f32.mxu0 0.0
        %420 = vmatmul.mubr.f32.gmra.mrb[0].mxu0 %v234
        %v421 = vpop.f32.mrb[0].mxu0
        %v422 = vadd.f32 %v295, %v421
        %v423 = vpop.f32.mrb[0].mxu0
        %v424 = vadd.f32 %v299, %v423
        %425 = vmatprep.mubr.f32.mxu0 0.0
        %426 = vmatmul.mubr.f32.gmra.mrb[0].mxu0 %v235
        %v427 = vpop.f32.mrb[0].mxu0
        %v428 = vadd.f32 %v295, %v427
        %v429 = vpop.f32.mrb[0].mxu0
        %v430 = vadd.f32 %v299, %v429
        %431 = vmatprep.mubr.f32.mxu0 0.0
        %432 = vmatmul.mubr.f32.gmra.mrb[0].mxu0 %v236
        %v433 = vpop.f32.mrb[0].mxu0
        %v434 = vadd.f32 %v295, %v433
        %v435 = vpop.f32.mrb[0].mxu0
        %v436 = vadd.f32 %v299, %v435
        %437 = vmatprep.mubr.f32.mxu0 0.0
        %438 = vmatmul.mubr.f32.gmra.mrb[0].mxu0 %v237
        %v439 = vpop.f32.mrb[0].mxu0
        %v440 = vadd.f32 %v295, %v439
        %v441 = vpop.f32.mrb[0].mxu0
        %v442 = vadd.f32 %v299, %v441
        %443 = vmatprep.mubr.f32.mxu0 0.0
        %444 = vmatmul.mubr.f32.gmra.mrb[0].mxu0 %v238
        %v445 = vpop.f32.mrb[0].mxu0
        %v446 = vadd.f32 %v295, %v445
        %v447 = vpop.f32.mrb[0].mxu0
        %v448 = vadd.f32 %v299, %v447
        %449 = vmatprep.mubr.f32.mxu0 0.0
        %450 = vmatmul.mubr.f32.gmra.mrb[0].mxu0 %v239
        %v451 = vpop.f32.mrb[0].mxu0
        %v452 = vadd.f32 %v295, %v451
        %v453 = vpop.f32.mrb[0].mxu0
        %v454 = vadd.f32 %v299, %v453
        %455 = vmatprep.mubr.f32.mxu0 0.0
        %456 = vmatmul.mubr.f32.gmra.mrb[0].mxu0 %v240
        %v457 = vpop.f32.mrb[0].mxu0
        %v458 = vadd.f32 %v295, %v457
        %v459 = vpop.f32.mrb[0].mxu0
        %v460 = vadd.f32 %v299, %v459
        %461 = vmatprep.mubr.f32.mxu0 0.0
        %462 = vmatmul.mubr.f32.gmra.mrb[0].mxu0 %v241
        %v463 = vpop.f32.mrb[0].mxu0
        %v464 = vadd.f32 %v295, %v463
        %v465 = vpop.f32.mrb[0].mxu0
        %v466 = vadd.f32 %v299, %v465
        %467 = vdwg.mxu0
        %468 = vmatprep.subr.mxu0 0.0
        %469 = vmatpush1.msra.mxu0 %v244
        %470 = vmatprep.subr.mxu0 0.0
        %471 = vmatpush1.msra.mxu0 %v247
        %472 = vmatprep.subr.mxu0 0.0
        %473 = vmatpush1.msra.mxu0 %v250
        %474 = vmatprep.subr.mxu0 0.0
        %475 = vmatpush1.msra.mxu0 %v253
        %476 = vmatprep.subr.mxu0 0.0
        %477 = vmatpush1.msra.mxu0 %v256
        %478 = vmatprep.subr.mxu0 0.0
        %479 = vmatpush1.msra.mxu0 %v259
        %480 = vmatprep.subr.mxu0 0.0
        %481 = vmatpush1.msra.mxu0 %v262
        %482 = vmatprep.subr.mxu0 0.0
        %483 = vmatpush1.msra.mxu0 %v265
        %484 = vmatprep.subr.mxu0 0.0
        %485 = vmatpush1.msra.mxu0 %v268
        %486 = vmatprep.subr.mxu0 0.0
        %487 = vmatpush1.msra.mxu0 %v271
        %488 = vmatprep.subr.mxu0 0.0
        %489 = vmatpush1.msra.mxu0 %v274
        %490 = vmatprep.subr.mxu0 0.0
        %491 = vmatpush1.msra.mxu0 %v277
        %492 = vmatprep.subr.mxu0 0.0
        %493 = vmatpush1.msra.mxu0 %v280
        %494 = vmatprep.subr.mxu0 0.0
        %495 = vmatpush1.msra.mxu0 %v283
        %496 = vmatprep.subr.mxu0 0.0
        %497 = vmatpush1.msra.mxu0 %v286
        %498 = vmatprep.subr.mxu0 0.0
        %499 = vmatpush1.msra.mxu0 %v289
        %500 = vmatprep.subr.mxu0 0.0
        %501 = vmatpush1.msra.mxu0 0.0
        %502 = vmatprep.subr.mxu0 0.0
        %503 = vmatpush1.msra.mxu0 0.0
        %504 = vmatprep.subr.mxu0 0.0
        %505 = vmatpush1.msra.mxu0 0.0
        %506 = vmatprep.subr.mxu0 0.0
        %507 = vmatpush1.msra.mxu0 0.0
        %508 = vmatprep.subr.mxu0 0.0
        %509 = vmatpush1.msra.mxu0 0.0
        %510 = vmatprep.subr.mxu0 0.0
        %511 = vmatpush1.msra.mxu0 0.0
        %512 = vmatprep.subr.mxu0 0.0
        %513 = vmatpush1.msra.mxu0 0.0
        %514 = vmatprep.subr.mxu0 0.0
        %515 = vmatpush1.msra.mxu0 0.0
        %516 = vmatprep.subr.mxu0 0.0
        %517 = vmatpush1.msra.mxu0 0.0
        %518 = vmatprep.subr.mxu0 0.0
        %519 = vmatpush1.msra.mxu0 0.0
        %520 = vmatprep.subr.mxu0 0.0
        %521 = vmatpush1.msra.mxu0 0.0
        %522 = vmatprep.subr.mxu0 0.0
        %523 = vmatpush1.msra.mxu0 0.0
        %524 = vmatprep.subr.mxu0 0.0
        %525 = vmatpush1.msra.mxu0 0.0
        %526 = vmatprep.subr.mxu0 0.0
        %527 = vmatpush1.msra.mxu0 0.0
        %528 = vmatprep.subr.mxu0 0.0
        %529 = vmatpush1.msra.mxu0 0.0
        %530 = vmatprep.subr.mxu0 0.0
        %531 = vmatpush1.msra.mxu0 0.0
        %532 = vmatprep.mubr.f32.mxu0 0.0
        %533 = vmatmul.mubr.f32.gmra.mrb[0].mxu0 %v226
        %v534 = vpop.f32.mrb[0].mxu0
        %v535 = vadd.f32 %v303, %v534
        %v536 = vpop.f32.mrb[0].mxu0
        %537 = vmatprep.mubr.f32.mxu0 0.0
        %538 = vmatmul.mubr.f32.gmra.mrb[0].mxu0 %v227
        %v539 = vpop.f32.mrb[0].mxu0
        %v540 = vadd.f32 %v303, %v539
        %v541 = vpop.f32.mrb[0].mxu0
        %542 = vmatprep.mubr.f32.mxu0 0.0
        %543 = vmatmul.mubr.f32.gmra.mrb[0].mxu0 %v228
        %v544 = vpop.f32.mrb[0].mxu0
        %v545 = vadd.f32 %v303, %v544
        %v546 = vpop.f32.mrb[0].mxu0
        %547 = vmatprep.mubr.f32.mxu0 0.0
        %548 = vmatmul.mubr.f32.gmra.mrb[0].mxu0 %v229
        %v549 = vpop.f32.mrb[0].mxu0
        %v550 = vadd.f32 %v303, %v549
        %v551 = vpop.f32.mrb[0].mxu0
        %552 = vmatprep.mubr.f32.mxu0 0.0
        %553 = vmatmul.mubr.f32.gmra.mrb[0].mxu0 %v230
        %v554 = vpop.f32.mrb[0].mxu0
        %v555 = vadd.f32 %v303, %v554
        %v556 = vpop.f32.mrb[0].mxu0
        %557 = vmatprep.mubr.f32.mxu0 0.0
        %558 = vmatmul.mubr.f32.gmra.mrb[0].mxu0 %v231
        %v559 = vpop.f32.mrb[0].mxu0
        %v560 = vadd.f32 %v303, %v559
        %v561 = vpop.f32.mrb[0].mxu0
        %562 = vmatprep.mubr.f32.mxu0 0.0
        %563 = vmatmul.mubr.f32.gmra.mrb[0].mxu0 %v232
        %v564 = vpop.f32.mrb[0].mxu0
        %v565 = vadd.f32 %v303, %v564
        %v566 = vpop.f32.mrb[0].mxu0
        %567 = vmatprep.mubr.f32.mxu0 0.0
        %568 = vmatmul.mubr.f32.gmra.mrb[0].mxu0 %v233
        %v569 = vpop.f32.mrb[0].mxu0
        %v570 = vadd.f32 %v303, %v569
        %v571 = vpop.f32.mrb[0].mxu0
        %572 = vmatprep.mubr.f32.mxu0 0.0
        %573 = vmatmul.mubr.f32.gmra.mrb[0].mxu0 %v234
        %v574 = vpop.f32.mrb[0].mxu0
        %v575 = vadd.f32 %v303, %v574
        %v576 = vpop.f32.mrb[0].mxu0
        %577 = vmatprep.mubr.f32.mxu0 0.0
        %578 = vmatmul.mubr.f32.gmra.mrb[0].mxu0 %v235
        %v579 = vpop.f32.mrb[0].mxu0
        %v580 = vadd.f32 %v303, %v579
        %v581 = vpop.f32.mrb[0].mxu0
        %582 = vmatprep.mubr.f32.mxu0 0.0
        %583 = vmatmul.mubr.f32.gmra.mrb[0].mxu0 %v236
        %v584 = vpop.f32.mrb[0].mxu0
        %v585 = vadd.f32 %v303, %v584
        %v586 = vpop.f32.mrb[0].mxu0
        %587 = vmatprep.mubr.f32.mxu0 0.0
        %588 = vmatmul.mubr.f32.gmra.mrb[0].mxu0 %v237
        %v589 = vpop.f32.mrb[0].mxu0
        %v590 = vadd.f32 %v303, %v589
        %v591 = vpop.f32.mrb[0].mxu0
        %592 = vmatprep.mubr.f32.mxu0 0.0
        %593 = vmatmul.mubr.f32.gmra.mrb[0].mxu0 %v238
        %v594 = vpop.f32.mrb[0].mxu0
        %v595 = vadd.f32 %v303, %v594
        %v596 = vpop.f32.mrb[0].mxu0
        %597 = vmatprep.mubr.f32.mxu0 0.0
        %598 = vmatmul.mubr.f32.gmra.mrb[0].mxu0 %v239
        %v599 = vpop.f32.mrb[0].mxu0
        %v600 = vadd.f32 %v303, %v599
        %v601 = vpop.f32.mrb[0].mxu0
        %602 = vmatprep.mubr.f32.mxu0 0.0
        %603 = vmatmul.mubr.f32.gmra.mrb[0].mxu0 %v240
        %v604 = vpop.f32.mrb[0].mxu0
        %v605 = vadd.f32 %v303, %v604
        %v606 = vpop.f32.mrb[0].mxu0
        %607 = vmatprep.mubr.f32.mxu0 0.0
        %608 = vmatmul.mubr.f32.gmra.mrb[0].mxu0 %v241
        %v609 = vpop.f32.mrb[0].mxu0
        %v610 = vadd.f32 %v303, %v609
        %v611 = vpop.f32.mrb[0].mxu0
        %612 = vdwg.mxu0
        %v613 = vpack.c.bf16 %v380, %v374
        %v614 = vpack.c.bf16 %v392, %v386
        %v615 = vpack.c.bf16 %v404, %v398
        %v616 = vpack.c.bf16 %v416, %v410
        %v617 = vpack.c.bf16 %v428, %v422
        %v618 = vpack.c.bf16 %v440, %v434
        %v619 = vpack.c.bf16 %v452, %v446
        %v620 = vpack.c.bf16 %v464, %v458
        %v621 = vpack.c.bf16 %v382, %v376
        %v622 = vpack.c.bf16 %v394, %v388
        %v623 = vpack.c.bf16 %v406, %v400
        %v624 = vpack.c.bf16 %v418, %v412
        %v625 = vpack.c.bf16 %v430, %v424
        %v626 = vpack.c.bf16 %v442, %v436
        %v627 = vpack.c.bf16 %v454, %v448
        %v628 = vpack.c.bf16 %v466, %v460
        %s629 = sshra.s32 %s225, 4
        %s630 = sand.u32 %s225, 15
        %s631 = smul.addr %s629, 8
        %s632 = scalar_lea.vmem [#allocation2], %s631
        %633 = vst [vmem:[%s632] sm:$0xff] %v621
        %634 = vst [vmem:[%s632 + $0x8] sm:$0xff] %v622
        %635 = vst [vmem:[%s632 + $0x10] sm:$0xff] %v623
        %636 = vst [vmem:[%s632 + $0x18] sm:$0xff] %v624
        %637 = vst [vmem:[%s632 + $0x20] sm:$0xff] %v625
        %638 = vst [vmem:[%s632 + $0x28] sm:$0xff] %v626
        %639 = vst [vmem:[%s632 + $0x30] sm:$0xff] %v627
        %640 = vst [vmem:[%s632 + $0x38] sm:$0xff] %v628
        %v641 = vpack.c.bf16 %v540, %v535
        %v642 = vpack.c.bf16 %v550, %v545
        %v643 = vpack.c.bf16 %v560, %v555
        %v644 = vpack.c.bf16 %v570, %v565
        %v645 = vpack.c.bf16 %v580, %v575
        %v646 = vpack.c.bf16 %v590, %v585
        %v647 = vpack.c.bf16 %v600, %v595
        %v648 = vpack.c.bf16 %v610, %v605
        %s649 = smul.addr %s629, 8
        %s650 = scalar_lea.vmem [#allocation3], %s649
        %651 = vst [vmem:[%s650] sm:$0xff] %v641
        %652 = vst [vmem:[%s650 + $0x8] sm:$0xff] %v642
        %653 = vst [vmem:[%s650 + $0x10] sm:$0xff] %v643
        %654 = vst [vmem:[%s650 + $0x18] sm:$0xff] %v644
        %655 = vst [vmem:[%s650 + $0x20] sm:$0xff] %v645
        %656 = vst [vmem:[%s650 + $0x28] sm:$0xff] %v646
        %657 = vst [vmem:[%s650 + $0x30] sm:$0xff] %v647
        %658 = vst [vmem:[%s650 + $0x38] sm:$0xff] %v648
        // While loop
        $region41: #{tpu_custom_call.1} parent=31 // loop_pre_header
          _
        $region42: #{tpu_custom_call.1} parent=31 // loop_header
          %s660 = sphi 0, %s662
          %p661 = scmp.ge.s32.totalorder %s660, %s26
          %v665 = vphi -inf, %v865
          %v666 = vphi -inf, %v866
          %v667 = vphi -inf, %v867
          %v668 = vphi -inf, %v868
          %v669 = vphi -inf, %v869
          %v670 = vphi -inf, %v870
          %v671 = vphi -inf, %v871
          %v672 = vphi -inf, %v872
          %v673 = vphi -inf, %v873
          %v674 = vphi -inf, %v874
          %v675 = vphi -inf, %v875
          %v676 = vphi -inf, %v876
          %v677 = vphi -inf, %v877
          %v678 = vphi -inf, %v878
          %v679 = vphi -inf, %v879
          %v680 = vphi -inf, %v880
          %v681 = vphi 0.0, %v1025
          %v682 = vphi 0.0, %v1026
          %v683 = vphi 0.0, %v1027
          %v684 = vphi 0.0, %v1028
          %v685 = vphi 0.0, %v1029
          %v686 = vphi 0.0, %v1030
          %v687 = vphi 0.0, %v1031
          %v688 = vphi 0.0, %v1032
          %v689 = vphi 0.0, %v1033
          %v690 = vphi 0.0, %v1034
          %v691 = vphi 0.0, %v1035
          %v692 = vphi 0.0, %v1036
          %v693 = vphi 0.0, %v1037
          %v694 = vphi 0.0, %v1038
          %v695 = vphi 0.0, %v1039
          %v696 = vphi 0.0, %v1040
          %v697 = vphi 0.0, %v1162
          %v698 = vphi 0.0, %v1163
          %v699 = vphi 0.0, %v1164
          %v700 = vphi 0.0, %v1165
          %v701 = vphi 0.0, %v1166
          %v702 = vphi 0.0, %v1167
          %v703 = vphi 0.0, %v1168
          %v704 = vphi 0.0, %v1169
          %v705 = vphi 0.0, %v1170
          %v706 = vphi 0.0, %v1171
          %v707 = vphi 0.0, %v1172
          %v708 = vphi 0.0, %v1173
          %v709 = vphi 0.0, %v1174
          %v710 = vphi 0.0, %v1175
          %v711 = vphi 0.0, %v1176
          %v712 = vphi 0.0, %v1177
        $region43: #{tpu_custom_call.1} parent=31 // loop_header_branch
          %664 = sbr.rel (%p661) target = $region47
        $region44: #{tpu_custom_call.1} parent=31 // loop_body
          %s713 = smul.u32 %s660, 128
          %s714 = sshra.s32 %s713, 4
          %s715 = sand.u32 %s713, 15
          %s716 = smul.addr %s714, 8
          %s717 = scalar_lea.vmem [#allocation2], %s716
          %v718 = vld [vmem:[%s717] sm:$0xff]
          %v719 = vld [vmem:[%s717 + $0x8] sm:$0xff]
          %v720 = vld [vmem:[%s717 + $0x10] sm:$0xff]
          %v721 = vld [vmem:[%s717 + $0x18] sm:$0xff]
          %v722 = vld [vmem:[%s717 + $0x20] sm:$0xff]
          %v723 = vld [vmem:[%s717 + $0x28] sm:$0xff]
          %v724 = vld [vmem:[%s717 + $0x30] sm:$0xff]
          %v725 = vld [vmem:[%s717 + $0x38] sm:$0xff]
          %s726 = smul.addr %s714, 8
          %s727 = scalar_lea.vmem [#allocation3], %s726
          %v728 = vld [vmem:[%s727] sm:$0xff]
          %v729 = vld [vmem:[%s727 + $0x8] sm:$0xff]
          %v730 = vld [vmem:[%s727 + $0x10] sm:$0xff]
          %v731 = vld [vmem:[%s727 + $0x18] sm:$0xff]
          %v732 = vld [vmem:[%s727 + $0x20] sm:$0xff]
          %v733 = vld [vmem:[%s727 + $0x28] sm:$0xff]
          %v734 = vld [vmem:[%s727 + $0x30] sm:$0xff]
          %v735 = vld [vmem:[%s727 + $0x38] sm:$0xff]
          %736 = vmatprep.subr.bf16.mxu0 0
          %737 = vmatpush1.bf16.xpose.msra.mxu0 %v718
          %738 = vmatprep.subr.bf16.mxu0 0
          %739 = vmatpush1.bf16.xpose.msra.mxu0 %v719
          %740 = vmatprep.subr.bf16.mxu0 0
          %741 = vmatpush1.bf16.xpose.msra.mxu0 %v720
          %742 = vmatprep.subr.bf16.mxu0 0
          %743 = vmatpush1.bf16.xpose.msra.mxu0 %v721
          %744 = vmatprep.subr.bf16.mxu0 0
          %745 = vmatpush1.bf16.xpose.msra.mxu0 %v722
          %746 = vmatprep.subr.bf16.mxu0 0
          %747 = vmatpush1.bf16.xpose.msra.mxu0 %v723
          %748 = vmatprep.subr.bf16.mxu0 0
          %749 = vmatpush1.bf16.xpose.msra.mxu0 %v724
          %750 = vmatprep.subr.bf16.mxu0 0
          %751 = vmatpush1.bf16.xpose.msra.mxu0 %v725
          %752 = vmatprep.subr.bf16.mxu0 0
          %753 = vmatpush1.bf16.xpose.msra.mxu0 0
          %754 = vmatprep.subr.bf16.mxu0 0
          %755 = vmatpush1.bf16.xpose.msra.mxu0 0
          %756 = vmatprep.subr.bf16.mxu0 0
          %757 = vmatpush1.bf16.xpose.msra.mxu0 0
          %758 = vmatprep.subr.bf16.mxu0 0
          %759 = vmatpush1.bf16.xpose.msra.mxu0 0
          %760 = vmatprep.subr.bf16.mxu0 0
          %761 = vmatpush1.bf16.xpose.msra.mxu0 0
          %762 = vmatprep.subr.bf16.mxu0 0
          %763 = vmatpush1.bf16.xpose.msra.mxu0 0
          %764 = vmatprep.subr.bf16.mxu0 0
          %765 = vmatpush1.bf16.xpose.msra.mxu0 0
          %766 = vmatprep.subr.bf16.mxu0 0
          %767 = vmatpush1.bf16.xpose.msra.mxu0 0
          %768 = vmatprep.mubr.bf16.mxu0 0
          %769 = vmatmul.mubr.bf16.gmra.mrb[0].mxu0 %v613
          %v770 = vpop.f32.mrb[0].mxu0
          %v771 = vadd.f32 0.0, %v770
          %v772 = vpop.f32.mrb[0].mxu0
          %v773 = vpop.f32.mrb[0].mxu0
          %v774 = vadd.f32 0.0, %v773
          %v775 = vpop.f32.mrb[0].mxu0
          %776 = vmatprep.mubr.bf16.mxu0 0
          %777 = vmatmul.mubr.bf16.gmra.mrb[0].mxu0 %v614
          %v778 = vpop.f32.mrb[0].mxu0
          %v779 = vadd.f32 0.0, %v778
          %v780 = vpop.f32.mrb[0].mxu0
          %v781 = vpop.f32.mrb[0].mxu0
          %v782 = vadd.f32 0.0, %v781
          %v783 = vpop.f32.mrb[0].mxu0
          %784 = vmatprep.mubr.bf16.mxu0 0
          %785 = vmatmul.mubr.bf16.gmra.mrb[0].mxu0 %v615
          %v786 = vpop.f32.mrb[0].mxu0
          %v787 = vadd.f32 0.0, %v786
          %v788 = vpop.f32.mrb[0].mxu0
          %v789 = vpop.f32.mrb[0].mxu0
          %v790 = vadd.f32 0.0, %v789
          %v791 = vpop.f32.mrb[0].mxu0
          %792 = vmatprep.mubr.bf16.mxu0 0
          %793 = vmatmul.mubr.bf16.gmra.mrb[0].mxu0 %v616
          %v794 = vpop.f32.mrb[0].mxu0
          %v795 = vadd.f32 0.0, %v794
          %v796 = vpop.f32.mrb[0].mxu0
          %v797 = vpop.f32.mrb[0].mxu0
          %v798 = vadd.f32 0.0, %v797
          %v799 = vpop.f32.mrb[0].mxu0
          %800 = vmatprep.mubr.bf16.mxu0 0
          %801 = vmatmul.mubr.bf16.gmra.mrb[0].mxu0 %v617
          %v802 = vpop.f32.mrb[0].mxu0
          %v803 = vadd.f32 0.0, %v802
          %v804 = vpop.f32.mrb[0].mxu0
          %v805 = vpop.f32.mrb[0].mxu0
          %v806 = vadd.f32 0.0, %v805
          %v807 = vpop.f32.mrb[0].mxu0
          %808 = vmatprep.mubr.bf16.mxu0 0
          %809 = vmatmul.mubr.bf16.gmra.mrb[0].mxu0 %v618
          %v810 = vpop.f32.mrb[0].mxu0
          %v811 = vadd.f32 0.0, %v810
          %v812 = vpop.f32.mrb[0].mxu0
          %v813 = vpop.f32.mrb[0].mxu0
          %v814 = vadd.f32 0.0, %v813
          %v815 = vpop.f32.mrb[0].mxu0
          %816 = vmatprep.mubr.bf16.mxu0 0
          %817 = vmatmul.mubr.bf16.gmra.mrb[0].mxu0 %v619
          %v818 = vpop.f32.mrb[0].mxu0
          %v819 = vadd.f32 0.0, %v818
          %v820 = vpop.f32.mrb[0].mxu0
          %v821 = vpop.f32.mrb[0].mxu0
          %v822 = vadd.f32 0.0, %v821
          %v823 = vpop.f32.mrb[0].mxu0
          %824 = vmatprep.mubr.bf16.mxu0 0
          %825 = vmatmul.mubr.bf16.gmra.mrb[0].mxu0 %v620
          %v826 = vpop.f32.mrb[0].mxu0
          %v827 = vadd.f32 0.0, %v826
          %v828 = vpop.f32.mrb[0].mxu0
          %v829 = vpop.f32.mrb[0].mxu0
          %v830 = vadd.f32 0.0, %v829
          %v831 = vpop.f32.mrb[0].mxu0
          %832 = vdwg.mxu0
          %833 = vmax.xlane.f32.xlu0 %v771
          %v834 = vpop.xlane.xlu0 %833
          %835 = vmax.xlane.f32.xlu0 %v774
          %v836 = vpop.xlane.xlu0 %835
          %837 = vmax.xlane.f32.xlu0 %v779
          %v838 = vpop.xlane.xlu0 %837
          %839 = vmax.xlane.f32.xlu0 %v782
          %v840 = vpop.xlane.xlu0 %839
          %841 = vmax.xlane.f32.xlu0 %v787
          %v842 = vpop.xlane.xlu0 %841
          %843 = vmax.xlane.f32.xlu0 %v790
          %v844 = vpop.xlane.xlu0 %843
          %845 = vmax.xlane.f32.xlu0 %v795
          %v846 = vpop.xlane.xlu0 %845
          %847 = vmax.xlane.f32.xlu0 %v798
          %v848 = vpop.xlane.xlu0 %847
          %849 = vmax.xlane.f32.xlu0 %v803
          %v850 = vpop.xlane.xlu0 %849
          %851 = vmax.xlane.f32.xlu0 %v806
          %v852 = vpop.xlane.xlu0 %851
          %853 = vmax.xlane.f32.xlu0 %v811
          %v854 = vpop.xlane.xlu0 %853
          %855 = vmax.xlane.f32.xlu0 %v814
          %v856 = vpop.xlane.xlu0 %855
          %857 = vmax.xlane.f32.xlu0 %v819
          %v858 = vpop.xlane.xlu0 %857
          %859 = vmax.xlane.f32.xlu0 %v822
          %v860 = vpop.xlane.xlu0 %859
          %861 = vmax.xlane.f32.xlu0 %v827
          %v862 = vpop.xlane.xlu0 %861
          %863 = vmax.xlane.f32.xlu0 %v830
          %v864 = vpop.xlane.xlu0 %863
          %v865 = vmax.f32 %v665, %v834
          %v866 = vmax.f32 %v666, %v836
          %v867 = vmax.f32 %v667, %v838
          %v868 = vmax.f32 %v668, %v840
          %v869 = vmax.f32 %v669, %v842
          %v870 = vmax.f32 %v670, %v844
          %v871 = vmax.f32 %v671, %v846
          %v872 = vmax.f32 %v672, %v848
          %v873 = vmax.f32 %v673, %v850
          %v874 = vmax.f32 %v674, %v852
          %v875 = vmax.f32 %v675, %v854
          %v876 = vmax.f32 %v676, %v856
          %v877 = vmax.f32 %v677, %v858
          %v878 = vmax.f32 %v678, %v860
          %v879 = vmax.f32 %v679, %v862
          %v880 = vmax.f32 %v680, %v864
          %v881 = vsub.f32 %v665, %v865
          %v882 = vsub.f32 %v666, %v866
          %v883 = vsub.f32 %v667, %v867
          %v884 = vsub.f32 %v668, %v868
          %v885 = vsub.f32 %v669, %v869
          %v886 = vsub.f32 %v670, %v870
          %v887 = vsub.f32 %v671, %v871
          %v888 = vsub.f32 %v672, %v872
          %v889 = vsub.f32 %v673, %v873
          %v890 = vsub.f32 %v674, %v874
          %v891 = vsub.f32 %v675, %v875
          %v892 = vsub.f32 %v676, %v876
          %v893 = vsub.f32 %v677, %v877
          %v894 = vsub.f32 %v678, %v878
          %v895 = vsub.f32 %v679, %v879
          %v896 = vsub.f32 %v680, %v880
          %v897 = vmul.f32 %v881, 1.442695
          %v898 = vpow.pop %v897
          %v899 = vmul.f32 %v882, 1.442695
          %v900 = vpow.pop %v899
          %v901 = vmul.f32 %v883, 1.442695
          %v902 = vpow.pop %v901
          %v903 = vmul.f32 %v884, 1.442695
          %v904 = vpow.pop %v903
          %v905 = vmul.f32 %v885, 1.442695
          %v906 = vpow.pop %v905
          %v907 = vmul.f32 %v886, 1.442695
          %v908 = vpow.pop %v907
          %v909 = vmul.f32 %v887, 1.442695
          %v910 = vpow.pop %v909
          %v911 = vmul.f32 %v888, 1.442695
          %v912 = vpow.pop %v911
          %v913 = vmul.f32 %v889, 1.442695
          %v914 = vpow.pop %v913
          %v915 = vmul.f32 %v890, 1.442695
          %v916 = vpow.pop %v915
          %v917 = vmul.f32 %v891, 1.442695
          %v918 = vpow.pop %v917
          %v919 = vmul.f32 %v892, 1.442695
          %v920 = vpow.pop %v919
          %v921 = vmul.f32 %v893, 1.442695
          %v922 = vpow.pop %v921
          %v923 = vmul.f32 %v894, 1.442695
          %v924 = vpow.pop %v923
          %v925 = vmul.f32 %v895, 1.442695
          %v926 = vpow.pop %v925
          %v927 = vmul.f32 %v896, 1.442695
          %v928 = vpow.pop %v927
          %v929 = vsub.f32 %v771, %v865
          %v930 = vsub.f32 %v774, %v866
          %v931 = vsub.f32 %v779, %v867
          %v932 = vsub.f32 %v782, %v868
          %v933 = vsub.f32 %v787, %v869
          %v934 = vsub.f32 %v790, %v870
          %v935 = vsub.f32 %v795, %v871
          %v936 = vsub.f32 %v798, %v872
          %v937 = vsub.f32 %v803, %v873
          %v938 = vsub.f32 %v806, %v874
          %v939 = vsub.f32 %v811, %v875
          %v940 = vsub.f32 %v814, %v876
          %v941 = vsub.f32 %v819, %v877
          %v942 = vsub.f32 %v822, %v878
          %v943 = vsub.f32 %v827, %v879
          %v944 = vsub.f32 %v830, %v880
          %v945 = vmul.f32 %v929, 1.442695
          %v946 = vpow.pop %v945
          %v947 = vmul.f32 %v930, 1.442695
          %v948 = vpow.pop %v947
          %v949 = vmul.f32 %v931, 1.442695
          %v950 = vpow.pop %v949
          %v951 = vmul.f32 %v932, 1.442695
          %v952 = vpow.pop %v951
          %v953 = vmul.f32 %v933, 1.442695
          %v954 = vpow.pop %v953
          %v955 = vmul.f32 %v934, 1.442695
          %v956 = vpow.pop %v955
          %v957 = vmul.f32 %v935, 1.442695
          %v958 = vpow.pop %v957
          %v959 = vmul.f32 %v936, 1.442695
          %v960 = vpow.pop %v959
          %v961 = vmul.f32 %v937, 1.442695
          %v962 = vpow.pop %v961
          %v963 = vmul.f32 %v938, 1.442695
          %v964 = vpow.pop %v963
          %v965 = vmul.f32 %v939, 1.442695
          %v966 = vpow.pop %v965
          %v967 = vmul.f32 %v940, 1.442695
          %v968 = vpow.pop %v967
          %v969 = vmul.f32 %v941, 1.442695
          %v970 = vpow.pop %v969
          %v971 = vmul.f32 %v942, 1.442695
          %v972 = vpow.pop %v971
          %v973 = vmul.f32 %v943, 1.442695
          %v974 = vpow.pop %v973
          %v975 = vmul.f32 %v944, 1.442695
          %v976 = vpow.pop %v975
          %v977 = vmul.f32 %v898, %v681
          %v978 = vmul.f32 %v900, %v682
          %v979 = vmul.f32 %v902, %v683
          %v980 = vmul.f32 %v904, %v684
          %v981 = vmul.f32 %v906, %v685
          %v982 = vmul.f32 %v908, %v686
          %v983 = vmul.f32 %v910, %v687
          %v984 = vmul.f32 %v912, %v688
          %v985 = vmul.f32 %v914, %v689
          %v986 = vmul.f32 %v916, %v690
          %v987 = vmul.f32 %v918, %v691
          %v988 = vmul.f32 %v920, %v692
          %v989 = vmul.f32 %v922, %v693
          %v990 = vmul.f32 %v924, %v694
          %v991 = vmul.f32 %v926, %v695
          %v992 = vmul.f32 %v928, %v696
          %993 = vadd.xlane.f32.xlu0 %v946
          %v994 = vpop.xlane.xlu0 %993
          %995 = vadd.xlane.f32.xlu0 %v948
          %v996 = vpop.xlane.xlu0 %995
          %997 = vadd.xlane.f32.xlu0 %v950
          %v998 = vpop.xlane.xlu0 %997
          %999 = vadd.xlane.f32.xlu0 %v952
          %v1000 = vpop.xlane.xlu0 %999
          %1001 = vadd.xlane.f32.xlu0 %v954
          %v1002 = vpop.xlane.xlu0 %1001
          %1003 = vadd.xlane.f32.xlu0 %v956
          %v1004 = vpop.xlane.xlu0 %1003
          %1005 = vadd.xlane.f32.xlu0 %v958
          %v1006 = vpop.xlane.xlu0 %1005
          %1007 = vadd.xlane.f32.xlu0 %v960
          %v1008 = vpop.xlane.xlu0 %1007
          %1009 = vadd.xlane.f32.xlu0 %v962
          %v1010 = vpop.xlane.xlu0 %1009
          %1011 = vadd.xlane.f32.xlu0 %v964
          %v1012 = vpop.xlane.xlu0 %1011
          %1013 = vadd.xlane.f32.xlu0 %v966
          %v1014 = vpop.xlane.xlu0 %1013
          %1015 = vadd.xlane.f32.xlu0 %v968
          %v1016 = vpop.xlane.xlu0 %1015
          %1017 = vadd.xlane.f32.xlu0 %v970
          %v1018 = vpop.xlane.xlu0 %1017
          %1019 = vadd.xlane.f32.xlu0 %v972
          %v1020 = vpop.xlane.xlu0 %1019
          %1021 = vadd.xlane.f32.xlu0 %v974
          %v1022 = vpop.xlane.xlu0 %1021
          %1023 = vadd.xlane.f32.xlu0 %v976
          %v1024 = vpop.xlane.xlu0 %1023
          %v1025 = vadd.f32 %v977, %v994
          %v1026 = vadd.f32 %v978, %v996
          %v1027 = vadd.f32 %v979, %v998
          %v1028 = vadd.f32 %v980, %v1000
          %v1029 = vadd.f32 %v981, %v1002
          %v1030 = vadd.f32 %v982, %v1004
          %v1031 = vadd.f32 %v983, %v1006
          %v1032 = vadd.f32 %v984, %v1008
          %v1033 = vadd.f32 %v985, %v1010
          %v1034 = vadd.f32 %v986, %v1012
          %v1035 = vadd.f32 %v987, %v1014
          %v1036 = vadd.f32 %v988, %v1016
          %v1037 = vadd.f32 %v989, %v1018
          %v1038 = vadd.f32 %v990, %v1020
          %v1039 = vadd.f32 %v991, %v1022
          %v1040 = vadd.f32 %v992, %v1024
          %v1041 = vmul.f32 %v898, %v697
          %v1042 = vmul.f32 %v900, %v698
          %v1043 = vmul.f32 %v902, %v699
          %v1044 = vmul.f32 %v904, %v700
          %v1045 = vmul.f32 %v906, %v701
          %v1046 = vmul.f32 %v908, %v702
          %v1047 = vmul.f32 %v910, %v703
          %v1048 = vmul.f32 %v912, %v704
          %v1049 = vmul.f32 %v914, %v705
          %v1050 = vmul.f32 %v916, %v706
          %v1051 = vmul.f32 %v918, %v707
          %v1052 = vmul.f32 %v920, %v708
          %v1053 = vmul.f32 %v922, %v709
          %v1054 = vmul.f32 %v924, %v710
          %v1055 = vmul.f32 %v926, %v711
          %v1056 = vmul.f32 %v928, %v712
          %v1057 = vpack.c.bf16 %v948, %v946
          %v1058 = vpack.c.bf16 %v952, %v950
          %v1059 = vpack.c.bf16 %v956, %v954
          %v1060 = vpack.c.bf16 %v960, %v958
          %v1061 = vpack.c.bf16 %v964, %v962
          %v1062 = vpack.c.bf16 %v968, %v966
          %v1063 = vpack.c.bf16 %v972, %v970
          %v1064 = vpack.c.bf16 %v976, %v974
          %1065 = vmatprep.subr.bf16.mxu0 0
          %1066 = vmatpush1.bf16.msra.mxu0 %v728
          %1067 = vmatprep.subr.bf16.mxu0 0
          %1068 = vmatpush1.bf16.msra.mxu0 %v729
          %1069 = vmatprep.subr.bf16.mxu0 0
          %1070 = vmatpush1.bf16.msra.mxu0 %v730
          %1071 = vmatprep.subr.bf16.mxu0 0
          %1072 = vmatpush1.bf16.msra.mxu0 %v731
          %1073 = vmatprep.subr.bf16.mxu0 0
          %1074 = vmatpush1.bf16.msra.mxu0 %v732
          %1075 = vmatprep.subr.bf16.mxu0 0
          %1076 = vmatpush1.bf16.msra.mxu0 %v733
          %1077 = vmatprep.subr.bf16.mxu0 0
          %1078 = vmatpush1.bf16.msra.mxu0 %v734
          %1079 = vmatprep.subr.bf16.mxu0 0
          %1080 = vmatpush1.bf16.msra.mxu0 %v735
          %1081 = vmatprep.subr.bf16.mxu0 0
          %1082 = vmatpush1.bf16.msra.mxu0 0
          %1083 = vmatprep.subr.bf16.mxu0 0
          %1084 = vmatpush1.bf16.msra.mxu0 0
          %1085 = vmatprep.subr.bf16.mxu0 0
          %1086 = vmatpush1.bf16.msra.mxu0 0
          %1087 = vmatprep.subr.bf16.mxu0 0
          %1088 = vmatpush1.bf16.msra.mxu0 0
          %1089 = vmatprep.subr.bf16.mxu0 0
          %1090 = vmatpush1.bf16.msra.mxu0 0
          %1091 = vmatprep.subr.bf16.mxu0 0
          %1092 = vmatpush1.bf16.msra.mxu0 0
          %1093 = vmatprep.subr.bf16.mxu0 0
          %1094 = vmatpush1.bf16.msra.mxu0 0
          %1095 = vmatprep.subr.bf16.mxu0 0
          %1096 = vmatpush1.bf16.msra.mxu0 0
          %1097 = vmatprep.mubr.bf16.mxu0 0
          %1098 = vmatmul.mubr.bf16.gmra.mrb[0].mxu0 %v1057
          %v1099 = vpop.f32.mrb[0].mxu0
          %v1100 = vadd.f32 0.0, %v1099
          %v1101 = vpop.f32.mrb[0].mxu0
          %v1102 = vpop.f32.mrb[0].mxu0
          %v1103 = vadd.f32 0.0, %v1102
          %v1104 = vpop.f32.mrb[0].mxu0
          %1105 = vmatprep.mubr.bf16.mxu0 0
          %1106 = vmatmul.mubr.bf16.gmra.mrb[0].mxu0 %v1058
          %v1107 = vpop.f32.mrb[0].mxu0
          %v1108 = vadd.f32 0.0, %v1107
          %v1109 = vpop.f32.mrb[0].mxu0
          %v1110 = vpop.f32.mrb[0].mxu0
          %v1111 = vadd.f32 0.0, %v1110
          %v1112 = vpop.f32.mrb[0].mxu0
          %1113 = vmatprep.mubr.bf16.mxu0 0
          %1114 = vmatmul.mubr.bf16.gmra.mrb[0].mxu0 %v1059
          %v1115 = vpop.f32.mrb[0].mxu0
          %v1116 = vadd.f32 0.0, %v1115
          %v1117 = vpop.f32.mrb[0].mxu0
          %v1118 = vpop.f32.mrb[0].mxu0
          %v1119 = vadd.f32 0.0, %v1118
          %v1120 = vpop.f32.mrb[0].mxu0
          %1121 = vmatprep.mubr.bf16.mxu0 0
          %1122 = vmatmul.mubr.bf16.gmra.mrb[0].mxu0 %v1060
          %v1123 = vpop.f32.mrb[0].mxu0
          %v1124 = vadd.f32 0.0, %v1123
          %v1125 = vpop.f32.mrb[0].mxu0
          %v1126 = vpop.f32.mrb[0].mxu0
          %v1127 = vadd.f32 0.0, %v1126
          %v1128 = vpop.f32.mrb[0].mxu0
          %1129 = vmatprep.mubr.bf16.mxu0 0
          %1130 = vmatmul.mubr.bf16.gmra.mrb[0].mxu0 %v1061
          %v1131 = vpop.f32.mrb[0].mxu0
          %v1132 = vadd.f32 0.0, %v1131
          %v1133 = vpop.f32.mrb[0].mxu0
          %v1134 = vpop.f32.mrb[0].mxu0
          %v1135 = vadd.f32 0.0, %v1134
          %v1136 = vpop.f32.mrb[0].mxu0
          %1137 = vmatprep.mubr.bf16.mxu0 0
          %1138 = vmatmul.mubr.bf16.gmra.mrb[0].mxu0 %v1062
          %v1139 = vpop.f32.mrb[0].mxu0
          %v1140 = vadd.f32 0.0, %v1139
          %v1141 = vpop.f32.mrb[0].mxu0
          %v1142 = vpop.f32.mrb[0].mxu0
          %v1143 = vadd.f32 0.0, %v1142
          %v1144 = vpop.f32.mrb[0].mxu0
          %1145 = vmatprep.mubr.bf16.mxu0 0
          %1146 = vmatmul.mubr.bf16.gmra.mrb[0].mxu0 %v1063
          %v1147 = vpop.f32.mrb[0].mxu0
          %v1148 = vadd.f32 0.0, %v1147
          %v1149 = vpop.f32.mrb[0].mxu0
          %v1150 = vpop.f32.mrb[0].mxu0
          %v1151 = vadd.f32 0.0, %v1150
          %v1152 = vpop.f32.mrb[0].mxu0
          %1153 = vmatprep.mubr.bf16.mxu0 0
          %1154 = vmatmul.mubr.bf16.gmra.mrb[0].mxu0 %v1064
          %v1155 = vpop.f32.mrb[0].mxu0
          %v1156 = vadd.f32 0.0, %v1155
          %v1157 = vpop.f32.mrb[0].mxu0
          %v1158 = vpop.f32.mrb[0].mxu0
          %v1159 = vadd.f32 0.0, %v1158
          %v1160 = vpop.f32.mrb[0].mxu0
          %1161 = vdwg.mxu0
          %v1162 = vadd.f32 %v1041, %v1100
          %v1163 = vadd.f32 %v1042, %v1103
          %v1164 = vadd.f32 %v1043, %v1108
          %v1165 = vadd.f32 %v1044, %v1111
          %v1166 = vadd.f32 %v1045, %v1116
          %v1167 = vadd.f32 %v1046, %v1119
          %v1168 = vadd.f32 %v1047, %v1124
          %v1169 = vadd.f32 %v1048, %v1127
          %v1170 = vadd.f32 %v1049, %v1132
          %v1171 = vadd.f32 %v1050, %v1135
          %v1172 = vadd.f32 %v1051, %v1140
          %v1173 = vadd.f32 %v1052, %v1143
          %v1174 = vadd.f32 %v1053, %v1148
          %v1175 = vadd.f32 %v1054, %v1151
          %v1176 = vadd.f32 %v1055, %v1156
          %v1177 = vadd.f32 %v1056, %v1159
        $region45: #{tpu_custom_call.1} parent=31 // loop_footer
          %s662 = sadd.s32 %s660, 1
        $region46: #{tpu_custom_call.1} parent=31 // loop_footer_branch
          %659 = sbr.rel target = $region42
        $region47: #{tpu_custom_call.1} parent=31 // loop_exit
          _
        %v1178 = vld [vmem:[%s632] sm:$0xff]
        %v1179 = vld [vmem:[%s632 + $0x8] sm:$0xff]
        %v1180 = vld [vmem:[%s632 + $0x10] sm:$0xff]
        %v1181 = vld [vmem:[%s632 + $0x18] sm:$0xff]
        %v1182 = vld [vmem:[%s632 + $0x20] sm:$0xff]
        %v1183 = vld [vmem:[%s632 + $0x28] sm:$0xff]
        %v1184 = vld [vmem:[%s632 + $0x30] sm:$0xff]
        %v1185 = vld [vmem:[%s632 + $0x38] sm:$0xff]
        %v1186 = vld [vmem:[%s650] sm:$0xff]
        %v1187 = vld [vmem:[%s650 + $0x8] sm:$0xff]
        %v1188 = vld [vmem:[%s650 + $0x10] sm:$0xff]
        %v1189 = vld [vmem:[%s650 + $0x18] sm:$0xff]
        %v1190 = vld [vmem:[%s650 + $0x20] sm:$0xff]
        %v1191 = vld [vmem:[%s650 + $0x28] sm:$0xff]
        %v1192 = vld [vmem:[%s650 + $0x30] sm:$0xff]
        %v1193 = vld [vmem:[%s650 + $0x38] sm:$0xff]
        %1194 = vmatprep.subr.bf16.mxu0 0
        %1195 = vmatpush1.bf16.xpose.msra.mxu0 %v1178
        %1196 = vmatprep.subr.bf16.mxu0 0
        %1197 = vmatpush1.bf16.xpose.msra.mxu0 %v1179
        %1198 = vmatprep.subr.bf16.mxu0 0
        %1199 = vmatpush1.bf16.xpose.msra.mxu0 %v1180
        %1200 = vmatprep.subr.bf16.mxu0 0
        %1201 = vmatpush1.bf16.xpose.msra.mxu0 %v1181
        %1202 = vmatprep.subr.bf16.mxu0 0
        %1203 = vmatpush1.bf16.xpose.msra.mxu0 %v1182
        %1204 = vmatprep.subr.bf16.mxu0 0
        %1205 = vmatpush1.bf16.xpose.msra.mxu0 %v1183
        %1206 = vmatprep.subr.bf16.mxu0 0
        %1207 = vmatpush1.bf16.xpose.msra.mxu0 %v1184
        %1208 = vmatprep.subr.bf16.mxu0 0
        %1209 = vmatpush1.bf16.xpose.msra.mxu0 %v1185
        %1210 = vmatprep.subr.bf16.mxu0 0
        %1211 = vmatpush1.bf16.xpose.msra.mxu0 0
        %1212 = vmatprep.subr.bf16.mxu0 0
        %1213 = vmatpush1.bf16.xpose.msra.mxu0 0
        %1214 = vmatprep.subr.bf16.mxu0 0
        %1215 = vmatpush1.bf16.xpose.msra.mxu0 0
        %1216 = vmatprep.subr.bf16.mxu0 0
        %1217 = vmatpush1.bf16.xpose.msra.mxu0 0
        %1218 = vmatprep.subr.bf16.mxu0 0
        %1219 = vmatpush1.bf16.xpose.msra.mxu0 0
        %1220 = vmatprep.subr.bf16.mxu0 0
        %1221 = vmatpush1.bf16.xpose.msra.mxu0 0
        %1222 = vmatprep.subr.bf16.mxu0 0
        %1223 = vmatpush1.bf16.xpose.msra.mxu0 0
        %1224 = vmatprep.subr.bf16.mxu0 0
        %1225 = vmatpush1.bf16.xpose.msra.mxu0 0
        %1226 = vmatprep.mubr.bf16.mxu0 0
        %1227 = vmatmul.mubr.bf16.gmra.mrb[0].mxu0 %v613
        %v1228 = vpop.f32.mrb[0].mxu0
        %v1229 = vadd.f32 0.0, %v1228
        %v1230 = vpop.f32.mrb[0].mxu0
        %v1231 = vpop.f32.mrb[0].mxu0
        %v1232 = vadd.f32 0.0, %v1231
        %v1233 = vpop.f32.mrb[0].mxu0
        %1234 = vmatprep.mubr.bf16.mxu0 0
        %1235 = vmatmul.mubr.bf16.gmra.mrb[0].mxu0 %v614
        %v1236 = vpop.f32.mrb[0].mxu0
        %v1237 = vadd.f32 0.0, %v1236
        %v1238 = vpop.f32.mrb[0].mxu0
        %v1239 = vpop.f32.mrb[0].mxu0
        %v1240 = vadd.f32 0.0, %v1239
        %v1241 = vpop.f32.mrb[0].mxu0
        %1242 = vmatprep.mubr.bf16.mxu0 0
        %1243 = vmatmul.mubr.bf16.gmra.mrb[0].mxu0 %v615
        %v1244 = vpop.f32.mrb[0].mxu0
        %v1245 = vadd.f32 0.0, %v1244
        %v1246 = vpop.f32.mrb[0].mxu0
        %v1247 = vpop.f32.mrb[0].mxu0
        %v1248 = vadd.f32 0.0, %v1247
        %v1249 = vpop.f32.mrb[0].mxu0
        %1250 = vmatprep.mubr.bf16.mxu0 0
        %1251 = vmatmul.mubr.bf16.gmra.mrb[0].mxu0 %v616
        %v1252 = vpop.f32.mrb[0].mxu0
        %v1253 = vadd.f32 0.0, %v1252
        %v1254 = vpop.f32.mrb[0].mxu0
        %v1255 = vpop.f32.mrb[0].mxu0
        %v1256 = vadd.f32 0.0, %v1255
        %v1257 = vpop.f32.mrb[0].mxu0
        %1258 = vmatprep.mubr.bf16.mxu0 0
        %1259 = vmatmul.mubr.bf16.gmra.mrb[0].mxu0 %v617
        %v1260 = vpop.f32.mrb[0].mxu0
        %v1261 = vadd.f32 0.0, %v1260
        %v1262 = vpop.f32.mrb[0].mxu0
        %v1263 = vpop.f32.mrb[0].mxu0
        %v1264 = vadd.f32 0.0, %v1263
        %v1265 = vpop.f32.mrb[0].mxu0
        %1266 = vmatprep.mubr.bf16.mxu0 0
        %1267 = vmatmul.mubr.bf16.gmra.mrb[0].mxu0 %v618
        %v1268 = vpop.f32.mrb[0].mxu0
        %v1269 = vadd.f32 0.0, %v1268
        %v1270 = vpop.f32.mrb[0].mxu0
        %v1271 = vpop.f32.mrb[0].mxu0
        %v1272 = vadd.f32 0.0, %v1271
        %v1273 = vpop.f32.mrb[0].mxu0
        %1274 = vmatprep.mubr.bf16.mxu0 0
        %1275 = vmatmul.mubr.bf16.gmra.mrb[0].mxu0 %v619
        %v1276 = vpop.f32.mrb[0].mxu0
        %v1277 = vadd.f32 0.0, %v1276
        %v1278 = vpop.f32.mrb[0].mxu0
        %v1279 = vpop.f32.mrb[0].mxu0
        %v1280 = vadd.f32 0.0, %v1279
        %v1281 = vpop.f32.mrb[0].mxu0
        %1282 = vmatprep.mubr.bf16.mxu0 0
        %1283 = vmatmul.mubr.bf16.gmra.mrb[0].mxu0 %v620
        %v1284 = vpop.f32.mrb[0].mxu0
        %v1285 = vadd.f32 0.0, %v1284
        %v1286 = vpop.f32.mrb[0].mxu0
        %v1287 = vpop.f32.mrb[0].mxu0
        %v1288 = vadd.f32 0.0, %v1287
        %v1289 = vpop.f32.mrb[0].mxu0
        %1290 = vdwg.mxu0
        %v1291 = vlaneseq
        %v1292 = vshrl.u32 %v1291, 7
        %v1293 = vadd.s32 %v1292, 8
        %v1294 = vadd.s32 %v1292, 16
        %v1295 = vadd.s32 %v1292, 24
        %v1296 = vadd.s32 %v1292, 32
        %v1297 = vadd.s32 %v1292, 40
        %v1298 = vadd.s32 %v1292, 48
        %v1299 = vadd.s32 %v1292, 56
        %v1300 = vadd.s32 %v1292, 64
        %v1301 = vadd.s32 %v1292, 72
        %v1302 = vadd.s32 %v1292, 80
        %v1303 = vadd.s32 %v1292, 88
        %v1304 = vadd.s32 %v1292, 96
        %v1305 = vadd.s32 %v1292, 104
        %v1306 = vadd.s32 %v1292, 112
        %v1307 = vadd.s32 %v1292, 120
        %v1308 = vstv %s225
        %v1309 = vadd.s32 %v1308, %v1292
        %v1310 = vadd.s32 %v1308, %v1293
        %v1311 = vadd.s32 %v1308, %v1294
        %v1312 = vadd.s32 %v1308, %v1295
        %v1313 = vadd.s32 %v1308, %v1296
        %v1314 = vadd.s32 %v1308, %v1297
        %v1315 = vadd.s32 %v1308, %v1298
        %v1316 = vadd.s32 %v1308, %v1299
        %v1317 = vadd.s32 %v1308, %v1300
        %v1318 = vadd.s32 %v1308, %v1301
        %v1319 = vadd.s32 %v1308, %v1302
        %v1320 = vadd.s32 %v1308, %v1303
        %v1321 = vadd.s32 %v1308, %v1304
        %v1322 = vadd.s32 %v1308, %v1305
        %v1323 = vadd.s32 %v1308, %v1306
        %v1324 = vadd.s32 %v1308, %v1307
        %v1325 = vlaneseq
        %v1326 = vand.u32 %v1325, 127
        %v1327 = vadd.s32 %v1308, %v1326
        %vm1328 = vcmp.gt.s32.totalorder %v1327, %v1309
        %vm1329 = vcmp.gt.s32.totalorder %v1327, %v1310
        %vm1330 = vcmp.gt.s32.totalorder %v1327, %v1311
        %vm1331 = vcmp.gt.s32.totalorder %v1327, %v1312
        %vm1332 = vcmp.gt.s32.totalorder %v1327, %v1313
        %vm1333 = vcmp.gt.s32.totalorder %v1327, %v1314
        %vm1334 = vcmp.gt.s32.totalorder %v1327, %v1315
        %vm1335 = vcmp.gt.s32.totalorder %v1327, %v1316
        %vm1336 = vcmp.gt.s32.totalorder %v1327, %v1317
        %vm1337 = vcmp.gt.s32.totalorder %v1327, %v1318
        %vm1338 = vcmp.gt.s32.totalorder %v1327, %v1319
        %vm1339 = vcmp.gt.s32.totalorder %v1327, %v1320
        %vm1340 = vcmp.gt.s32.totalorder %v1327, %v1321
        %vm1341 = vcmp.gt.s32.totalorder %v1327, %v1322
        %vm1342 = vcmp.gt.s32.totalorder %v1327, %v1323
        %vm1343 = vcmp.gt.s32.totalorder %v1327, %v1324
        %v1344 = vsel %vm1328, -1e+30, %v1229
        %v1345 = vsel %vm1329, -1e+30, %v1232
        %v1346 = vsel %vm1330, -1e+30, %v1237
        %v1347 = vsel %vm1331, -1e+30, %v1240
        %v1348 = vsel %vm1332, -1e+30, %v1245
        %v1349 = vsel %vm1333, -1e+30, %v1248
        %v1350 = vsel %vm1334, -1e+30, %v1253
        %v1351 = vsel %vm1335, -1e+30, %v1256
        %v1352 = vsel %vm1336, -1e+30, %v1261
        %v1353 = vsel %vm1337, -1e+30, %v1264
        %v1354 = vsel %vm1338, -1e+30, %v1269
        %v1355 = vsel %vm1339, -1e+30, %v1272
        %v1356 = vsel %vm1340, -1e+30, %v1277
        %v1357 = vsel %vm1341, -1e+30, %v1280
        %v1358 = vsel %vm1342, -1e+30, %v1285
        %v1359 = vsel %vm1343, -1e+30, %v1288
        %1360 = vmax.xlane.f32.xlu0 %v1344
        %v1361 = vpop.xlane.xlu0 %1360
        %1362 = vmax.xlane.f32.xlu0 %v1345
        %v1363 = vpop.xlane.xlu0 %1362
        %1364 = vmax.xlane.f32.xlu0 %v1346
        %v1365 = vpop.xlane.xlu0 %1364
        %1366 = vmax.xlane.f32.xlu0 %v1347
        %v1367 = vpop.xlane.xlu0 %1366
        %1368 = vmax.xlane.f32.xlu0 %v1348
        %v1369 = vpop.xlane.xlu0 %1368
        %1370 = vmax.xlane.f32.xlu0 %v1349
        %v1371 = vpop.xlane.xlu0 %1370
        %1372 = vmax.xlane.f32.xlu0 %v1350
        %v1373 = vpop.xlane.xlu0 %1372
        %1374 = vmax.xlane.f32.xlu0 %v1351
        %v1375 = vpop.xlane.xlu0 %1374
        %1376 = vmax.xlane.f32.xlu0 %v1352
        %v1377 = vpop.xlane.xlu0 %1376
        %1378 = vmax.xlane.f32.xlu0 %v1353
        %v1379 = vpop.xlane.xlu0 %1378
        %1380 = vmax.xlane.f32.xlu0 %v1354
        %v1381 = vpop.xlane.xlu0 %1380
        %1382 = vmax.xlane.f32.xlu0 %v1355
        %v1383 = vpop.xlane.xlu0 %1382
        %1384 = vmax.xlane.f32.xlu0 %v1356
        %v1385 = vpop.xlane.xlu0 %1384
        %1386 = vmax.xlane.f32.xlu0 %v1357
        %v1387 = vpop.xlane.xlu0 %1386
        %1388 = vmax.xlane.f32.xlu0 %v1358
        %v1389 = vpop.xlane.xlu0 %1388
        %1390 = vmax.xlane.f32.xlu0 %v1359
        %v1391 = vpop.xlane.xlu0 %1390
        %v1392 = vmax.f32 %v665, %v1361
        %v1393 = vmax.f32 %v666, %v1363
        %v1394 = vmax.f32 %v667, %v1365
        %v1395 = vmax.f32 %v668, %v1367
        %v1396 = vmax.f32 %v669, %v1369
        %v1397 = vmax.f32 %v670, %v1371
        %v1398 = vmax.f32 %v671, %v1373
        %v1399 = vmax.f32 %v672, %v1375
        %v1400 = vmax.f32 %v673, %v1377
        %v1401 = vmax.f32 %v674, %v1379
        %v1402 = vmax.f32 %v675, %v1381
        %v1403 = vmax.f32 %v676, %v1383
        %v1404 = vmax.f32 %v677, %v1385
        %v1405 = vmax.f32 %v678, %v1387
        %v1406 = vmax.f32 %v679, %v1389
        %v1407 = vmax.f32 %v680, %v1391
        %v1408 = vsub.f32 %v665, %v1392
        %v1409 = vsub.f32 %v666, %v1393
        %v1410 = vsub.f32 %v667, %v1394
        %v1411 = vsub.f32 %v668, %v1395
        %v1412 = vsub.f32 %v669, %v1396
        %v1413 = vsub.f32 %v670, %v1397
        %v1414 = vsub.f32 %v671, %v1398
        %v1415 = vsub.f32 %v672, %v1399
        %v1416 = vsub.f32 %v673, %v1400
        %v1417 = vsub.f32 %v674, %v1401
        %v1418 = vsub.f32 %v675, %v1402
        %v1419 = vsub.f32 %v676, %v1403
        %v1420 = vsub.f32 %v677, %v1404
        %v1421 = vsub.f32 %v678, %v1405
        %v1422 = vsub.f32 %v679, %v1406
        %v1423 = vsub.f32 %v680, %v1407
        %v1424 = vmul.f32 %v1408, 1.442695
        %v1425 = vpow.pop %v1424
        %v1426 = vmul.f32 %v1409, 1.442695
        %v1427 = vpow.pop %v1426
        %v1428 = vmul.f32 %v1410, 1.442695
        %v1429 = vpow.pop %v1428
        %v1430 = vmul.f32 %v1411, 1.442695
        %v1431 = vpow.pop %v1430
        %v1432 = vmul.f32 %v1412, 1.442695
        %v1433 = vpow.pop %v1432
        %v1434 = vmul.f32 %v1413, 1.442695
        %v1435 = vpow.pop %v1434
        %v1436 = vmul.f32 %v1414, 1.442695
        %v1437 = vpow.pop %v1436
        %v1438 = vmul.f32 %v1415, 1.442695
        %v1439 = vpow.pop %v1438
        %v1440 = vmul.f32 %v1416, 1.442695
        %v1441 = vpow.pop %v1440
        %v1442 = vmul.f32 %v1417, 1.442695
        %v1443 = vpow.pop %v1442
        %v1444 = vmul.f32 %v1418, 1.442695
        %v1445 = vpow.pop %v1444
        %v1446 = vmul.f32 %v1419, 1.442695
        %v1447 = vpow.pop %v1446
        %v1448 = vmul.f32 %v1420, 1.442695
        %v1449 = vpow.pop %v1448
        %v1450 = vmul.f32 %v1421, 1.442695
        %v1451 = vpow.pop %v1450
        %v1452 = vmul.f32 %v1422, 1.442695
        %v1453 = vpow.pop %v1452
        %v1454 = vmul.f32 %v1423, 1.442695
        %v1455 = vpow.pop %v1454
        %v1456 = vsub.f32 %v1344, %v1392
        %v1457 = vsub.f32 %v1345, %v1393
        %v1458 = vsub.f32 %v1346, %v1394
        %v1459 = vsub.f32 %v1347, %v1395
        %v1460 = vsub.f32 %v1348, %v1396
        %v1461 = vsub.f32 %v1349, %v1397
        %v1462 = vsub.f32 %v1350, %v1398
        %v1463 = vsub.f32 %v1351, %v1399
        %v1464 = vsub.f32 %v1352, %v1400
        %v1465 = vsub.f32 %v1353, %v1401
        %v1466 = vsub.f32 %v1354, %v1402
        %v1467 = vsub.f32 %v1355, %v1403
        %v1468 = vsub.f32 %v1356, %v1404
        %v1469 = vsub.f32 %v1357, %v1405
        %v1470 = vsub.f32 %v1358, %v1406
        %v1471 = vsub.f32 %v1359, %v1407
        %v1472 = vmul.f32 %v1456, 1.442695
        %v1473 = vpow.pop %v1472
        %v1474 = vmul.f32 %v1457, 1.442695
        %v1475 = vpow.pop %v1474
        %v1476 = vmul.f32 %v1458, 1.442695
        %v1477 = vpow.pop %v1476
        %v1478 = vmul.f32 %v1459, 1.442695
        %v1479 = vpow.pop %v1478
        %v1480 = vmul.f32 %v1460, 1.442695
        %v1481 = vpow.pop %v1480
        %v1482 = vmul.f32 %v1461, 1.442695
        %v1483 = vpow.pop %v1482
        %v1484 = vmul.f32 %v1462, 1.442695
        %v1485 = vpow.pop %v1484
        %v1486 = vmul.f32 %v1463, 1.442695
        %v1487 = vpow.pop %v1486
        %v1488 = vmul.f32 %v1464, 1.442695
        %v1489 = vpow.pop %v1488
        %v1490 = vmul.f32 %v1465, 1.442695
        %v1491 = vpow.pop %v1490
        %v1492 = vmul.f32 %v1466, 1.442695
        %v1493 = vpow.pop %v1492
        %v1494 = vmul.f32 %v1467, 1.442695
        %v1495 = vpow.pop %v1494
        %v1496 = vmul.f32 %v1468, 1.442695
        %v1497 = vpow.pop %v1496
        %v1498 = vmul.f32 %v1469, 1.442695
        %v1499 = vpow.pop %v1498
        %v1500 = vmul.f32 %v1470, 1.442695
        %v1501 = vpow.pop %v1500
        %v1502 = vmul.f32 %v1471, 1.442695
        %v1503 = vpow.pop %v1502
        %v1504 = vmul.f32 %v1425, %v681
        %v1505 = vmul.f32 %v1427, %v682
        %v1506 = vmul.f32 %v1429, %v683
        %v1507 = vmul.f32 %v1431, %v684
        %v1508 = vmul.f32 %v1433, %v685
        %v1509 = vmul.f32 %v1435, %v686
        %v1510 = vmul.f32 %v1437, %v687
        %v1511 = vmul.f32 %v1439, %v688
        %v1512 = vmul.f32 %v1441, %v689
        %v1513 = vmul.f32 %v1443, %v690
        %v1514 = vmul.f32 %v1445, %v691
        %v1515 = vmul.f32 %v1447, %v692
        %v1516 = vmul.f32 %v1449, %v693
        %v1517 = vmul.f32 %v1451, %v694
        %v1518 = vmul.f32 %v1453, %v695
        %v1519 = vmul.f32 %v1455, %v696
        %1520 = vadd.xlane.f32.xlu0 %v1473
        %v1521 = vpop.xlane.xlu0 %1520
        %1522 = vadd.xlane.f32.xlu0 %v1475
        %v1523 = vpop.xlane.xlu0 %1522
        %1524 = vadd.xlane.f32.xlu0 %v1477
        %v1525 = vpop.xlane.xlu0 %1524
        %1526 = vadd.xlane.f32.xlu0 %v1479
        %v1527 = vpop.xlane.xlu0 %1526
        %1528 = vadd.xlane.f32.xlu0 %v1481
        %v1529 = vpop.xlane.xlu0 %1528
        %1530 = vadd.xlane.f32.xlu0 %v1483
        %v1531 = vpop.xlane.xlu0 %1530
        %1532 = vadd.xlane.f32.xlu0 %v1485
        %v1533 = vpop.xlane.xlu0 %1532
        %1534 = vadd.xlane.f32.xlu0 %v1487
        %v1535 = vpop.xlane.xlu0 %1534
        %1536 = vadd.xlane.f32.xlu0 %v1489
        %v1537 = vpop.xlane.xlu0 %1536
        %1538 = vadd.xlane.f32.xlu0 %v1491
        %v1539 = vpop.xlane.xlu0 %1538
        %1540 = vadd.xlane.f32.xlu0 %v1493
        %v1541 = vpop.xlane.xlu0 %1540
        %1542 = vadd.xlane.f32.xlu0 %v1495
        %v1543 = vpop.xlane.xlu0 %1542
        %1544 = vadd.xlane.f32.xlu0 %v1497
        %v1545 = vpop.xlane.xlu0 %1544
        %1546 = vadd.xlane.f32.xlu0 %v1499
        %v1547 = vpop.xlane.xlu0 %1546
        %1548 = vadd.xlane.f32.xlu0 %v1501
        %v1549 = vpop.xlane.xlu0 %1548
        %1550 = vadd.xlane.f32.xlu0 %v1503
        %v1551 = vpop.xlane.xlu0 %1550
        %v1552 = vadd.f32 %v1504, %v1521
        %v1553 = vadd.f32 %v1505, %v1523
        %v1554 = vadd.f32 %v1506, %v1525
        %v1555 = vadd.f32 %v1507, %v1527
        %v1556 = vadd.f32 %v1508, %v1529
        %v1557 = vadd.f32 %v1509, %v1531
        %v1558 = vadd.f32 %v1510, %v1533
        %v1559 = vadd.f32 %v1511, %v1535
        %v1560 = vadd.f32 %v1512, %v1537
        %v1561 = vadd.f32 %v1513, %v1539
        %v1562 = vadd.f32 %v1514, %v1541
        %v1563 = vadd.f32 %v1515, %v1543
        %v1564 = vadd.f32 %v1516, %v1545
        %v1565 = vadd.f32 %v1517, %v1547
        %v1566 = vadd.f32 %v1518, %v1549
        %v1567 = vadd.f32 %v1519, %v1551
        %v1568 = vmul.f32 %v1425, %v697
        %v1569 = vmul.f32 %v1427, %v698
        %v1570 = vmul.f32 %v1429, %v699
        %v1571 = vmul.f32 %v1431, %v700
        %v1572 = vmul.f32 %v1433, %v701
        %v1573 = vmul.f32 %v1435, %v702
        %v1574 = vmul.f32 %v1437, %v703
        %v1575 = vmul.f32 %v1439, %v704
        %v1576 = vmul.f32 %v1441, %v705
        %v1577 = vmul.f32 %v1443, %v706
        %v1578 = vmul.f32 %v1445, %v707
        %v1579 = vmul.f32 %v1447, %v708
        %v1580 = vmul.f32 %v1449, %v709
        %v1581 = vmul.f32 %v1451, %v710
        %v1582 = vmul.f32 %v1453, %v711
        %v1583 = vmul.f32 %v1455, %v712
        %v1584 = vpack.c.bf16 %v1475, %v1473
        %v1585 = vpack.c.bf16 %v1479, %v1477
        %v1586 = vpack.c.bf16 %v1483, %v1481
        %v1587 = vpack.c.bf16 %v1487, %v1485
        %v1588 = vpack.c.bf16 %v1491, %v1489
        %v1589 = vpack.c.bf16 %v1495, %v1493
        %v1590 = vpack.c.bf16 %v1499, %v1497
        %v1591 = vpack.c.bf16 %v1503, %v1501
        %1592 = vmatprep.subr.bf16.mxu0 0
        %1593 = vmatpush1.bf16.msra.mxu0 %v1186
        %1594 = vmatprep.subr.bf16.mxu0 0
        %1595 = vmatpush1.bf16.msra.mxu0 %v1187
        %1596 = vmatprep.subr.bf16.mxu0 0
        %1597 = vmatpush1.bf16.msra.mxu0 %v1188
        %1598 = vmatprep.subr.bf16.mxu0 0
        %1599 = vmatpush1.bf16.msra.mxu0 %v1189
        %1600 = vmatprep.subr.bf16.mxu0 0
        %1601 = vmatpush1.bf16.msra.mxu0 %v1190
        %1602 = vmatprep.subr.bf16.mxu0 0
        %1603 = vmatpush1.bf16.msra.mxu0 %v1191
        %1604 = vmatprep.subr.bf16.mxu0 0
        %1605 = vmatpush1.bf16.msra.mxu0 %v1192
        %1606 = vmatprep.subr.bf16.mxu0 0
        %1607 = vmatpush1.bf16.msra.mxu0 %v1193
        %1608 = vmatprep.subr.bf16.mxu0 0
        %1609 = vmatpush1.bf16.msra.mxu0 0
        %1610 = vmatprep.subr.bf16.mxu0 0
        %1611 = vmatpush1.bf16.msra.mxu0 0
        %1612 = vmatprep.subr.bf16.mxu0 0
        %1613 = vmatpush1.bf16.msra.mxu0 0
        %1614 = vmatprep.subr.bf16.mxu0 0
        %1615 = vmatpush1.bf16.msra.mxu0 0
        %1616 = vmatprep.subr.bf16.mxu0 0
        %1617 = vmatpush1.bf16.msra.mxu0 0
        %1618 = vmatprep.subr.bf16.mxu0 0
        %1619 = vmatpush1.bf16.msra.mxu0 0
        %1620 = vmatprep.subr.bf16.mxu0 0
        %1621 = vmatpush1.bf16.msra.mxu0 0
        %1622 = vmatprep.subr.bf16.mxu0 0
        %1623 = vmatpush1.bf16.msra.mxu0 0
        %1624 = vmatprep.mubr.bf16.mxu0 0
        %1625 = vmatmul.mubr.bf16.gmra.mrb[0].mxu0 %v1584
        %v1626 = vpop.f32.mrb[0].mxu0
        %v1627 = vadd.f32 0.0, %v1626
        %v1628 = vpop.f32.mrb[0].mxu0
        %v1629 = vpop.f32.mrb[0].mxu0
        %v1630 = vadd.f32 0.0, %v1629
        %v1631 = vpop.f32.mrb[0].mxu0
        %1632 = vmatprep.mubr.bf16.mxu0 0
        %1633 = vmatmul.mubr.bf16.gmra.mrb[0].mxu0 %v1585
        %v1634 = vpop.f32.mrb[0].mxu0
        %v1635 = vadd.f32 0.0, %v1634
        %v1636 = vpop.f32.mrb[0].mxu0
        %v1637 = vpop.f32.mrb[0].mxu0
        %v1638 = vadd.f32 0.0, %v1637
        %v1639 = vpop.f32.mrb[0].mxu0
        %1640 = vmatprep.mubr.bf16.mxu0 0
        %1641 = vmatmul.mubr.bf16.gmra.mrb[0].mxu0 %v1586
        %v1642 = vpop.f32.mrb[0].mxu0
        %v1643 = vadd.f32 0.0, %v1642
        %v1644 = vpop.f32.mrb[0].mxu0
        %v1645 = vpop.f32.mrb[0].mxu0
        %v1646 = vadd.f32 0.0, %v1645
        %v1647 = vpop.f32.mrb[0].mxu0
        %1648 = vmatprep.mubr.bf16.mxu0 0
        %1649 = vmatmul.mubr.bf16.gmra.mrb[0].mxu0 %v1587
        %v1650 = vpop.f32.mrb[0].mxu0
        %v1651 = vadd.f32 0.0, %v1650
        %v1652 = vpop.f32.mrb[0].mxu0
        %v1653 = vpop.f32.mrb[0].mxu0
        %v1654 = vadd.f32 0.0, %v1653
        %v1655 = vpop.f32.mrb[0].mxu0
        %1656 = vmatprep.mubr.bf16.mxu0 0
        %1657 = vmatmul.mubr.bf16.gmra.mrb[0].mxu0 %v1588
        %v1658 = vpop.f32.mrb[0].mxu0
        %v1659 = vadd.f32 0.0, %v1658
        %v1660 = vpop.f32.mrb[0].mxu0
        %v1661 = vpop.f32.mrb[0].mxu0
        %v1662 = vadd.f32 0.0, %v1661
        %v1663 = vpop.f32.mrb[0].mxu0
        %1664 = vmatprep.mubr.bf16.mxu0 0
        %1665 = vmatmul.mubr.bf16.gmra.mrb[0].mxu0 %v1589
        %v1666 = vpop.f32.mrb[0].mxu0
        %v1667 = vadd.f32 0.0, %v1666
        %v1668 = vpop.f32.mrb[0].mxu0
        %v1669 = vpop.f32.mrb[0].mxu0
        %v1670 = vadd.f32 0.0, %v1669
        %v1671 = vpop.f32.mrb[0].mxu0
        %1672 = vmatprep.mubr.bf16.mxu0 0
        %1673 = vmatmul.mubr.bf16.gmra.mrb[0].mxu0 %v1590
        %v1674 = vpop.f32.mrb[0].mxu0
        %v1675 = vadd.f32 0.0, %v1674
        %v1676 = vpop.f32.mrb[0].mxu0
        %v1677 = vpop.f32.mrb[0].mxu0
        %v1678 = vadd.f32 0.0, %v1677
        %v1679 = vpop.f32.mrb[0].mxu0
        %1680 = vmatprep.mubr.bf16.mxu0 0
        %1681 = vmatmul.mubr.bf16.gmra.mrb[0].mxu0 %v1591
        %v1682 = vpop.f32.mrb[0].mxu0
        %v1683 = vadd.f32 0.0, %v1682
        %v1684 = vpop.f32.mrb[0].mxu0
        %v1685 = vpop.f32.mrb[0].mxu0
        %v1686 = vadd.f32 0.0, %v1685
        %v1687 = vpop.f32.mrb[0].mxu0
        %1688 = vdwg.mxu0
        %v1689 = vadd.f32 %v1568, %v1627
        %v1690 = vadd.f32 %v1569, %v1630
        %v1691 = vadd.f32 %v1570, %v1635
        %v1692 = vadd.f32 %v1571, %v1638
        %v1693 = vadd.f32 %v1572, %v1643
        %v1694 = vadd.f32 %v1573, %v1646
        %v1695 = vadd.f32 %v1574, %v1651
        %v1696 = vadd.f32 %v1575, %v1654
        %v1697 = vadd.f32 %v1576, %v1659
        %v1698 = vadd.f32 %v1577, %v1662
        %v1699 = vadd.f32 %v1578, %v1667
        %v1700 = vadd.f32 %v1579, %v1670
        %v1701 = vadd.f32 %v1580, %v1675
        %v1702 = vadd.f32 %v1581, %v1678
        %v1703 = vadd.f32 %v1582, %v1683
        %v1704 = vadd.f32 %v1583, %v1686
        %v1705 = vrcp.pop %v1552
        %v1706 = vrcp.pop %v1553
        %v1707 = vrcp.pop %v1554
        %v1708 = vrcp.pop %v1555
        %v1709 = vrcp.pop %v1556
        %v1710 = vrcp.pop %v1557
        %v1711 = vrcp.pop %v1558
        %v1712 = vrcp.pop %v1559
        %v1713 = vrcp.pop %v1560
        %v1714 = vrcp.pop %v1561
        %v1715 = vrcp.pop %v1562
        %v1716 = vrcp.pop %v1563
        %v1717 = vrcp.pop %v1564
        %v1718 = vrcp.pop %v1565
        %v1719 = vrcp.pop %v1566
        %v1720 = vrcp.pop %v1567
        %v1721 = vmul.f32 %v1689, %v1705
        %v1722 = vmul.f32 %v1690, %v1706
        %v1723 = vmul.f32 %v1691, %v1707
        %v1724 = vmul.f32 %v1692, %v1708
        %v1725 = vmul.f32 %v1693, %v1709
        %v1726 = vmul.f32 %v1694, %v1710
        %v1727 = vmul.f32 %v1695, %v1711
        %v1728 = vmul.f32 %v1696, %v1712
        %v1729 = vmul.f32 %v1697, %v1713
        %v1730 = vmul.f32 %v1698, %v1714
        %v1731 = vmul.f32 %v1699, %v1715
        %v1732 = vmul.f32 %v1700, %v1716
        %v1733 = vmul.f32 %v1701, %v1717
        %v1734 = vmul.f32 %v1702, %v1718
        %v1735 = vmul.f32 %v1703, %v1719
        %v1736 = vmul.f32 %v1704, %v1720
        %1737 = vst [vmem:[%s221] sm:$0xff] %v1721
        %1738 = vst [vmem:[%s221 + $0x8] sm:$0xff] %v1722
        %1739 = vst [vmem:[%s221 + $0x10] sm:$0xff] %v1723
        %1740 = vst [vmem:[%s221 + $0x18] sm:$0xff] %v1724
        %1741 = vst [vmem:[%s221 + $0x20] sm:$0xff] %v1725
        %1742 = vst [vmem:[%s221 + $0x28] sm:$0xff] %v1726
        %1743 = vst [vmem:[%s221 + $0x30] sm:$0xff] %v1727
        %1744 = vst [vmem:[%s221 + $0x38] sm:$0xff] %v1728
        %1745 = vst [vmem:[%s221 + $0x40] sm:$0xff] %v1729
        %1746 = vst [vmem:[%s221 + $0x48] sm:$0xff] %v1730
        %1747 = vst [vmem:[%s221 + $0x50] sm:$0xff] %v1731
        %1748 = vst [vmem:[%s221 + $0x58] sm:$0xff] %v1732
        %1749 = vst [vmem:[%s221 + $0x60] sm:$0xff] %v1733
        %1750 = vst [vmem:[%s221 + $0x68] sm:$0xff] %v1734
        %1751 = vst [vmem:[%s221 + $0x70] sm:$0xff] %v1735
        %1752 = vst [vmem:[%s221 + $0x78] sm:$0xff] %v1736
        %s1753 = sand.u32 %s113, 1
        %s1754 = scalar_lea.sflag [#allocation6], %s1753
        %s1755 = sand.u32 %s113, 1
        %s1756 = smul.addr %s1755, 128
        %s1757 = scalar_lea.vmem [#allocation9], %s1756
        // Predicated region
        $region48: #{tpu_custom_call.1} parent=31 // pred_check
          %p1758 = pneg %p123
        $region49: #{tpu_custom_call.1} parent=31 // pred_check_branch
          %1760 = sbr.rel (%p1758) target = $region51
        $region50: #{tpu_custom_call.1} parent=31 // pred_region
          %s1761 = smul.u32 16, %s26
          %s1763 = ssub.s32 2048, 2048
          %1764 = vsyncadd %s1754, %s1763
          %s1765 = smul.addr %s25, 16
          %s1766 = sadd.s32 %s1761, %s1765
          %s1767 = smul.addr %s1766, 128
          %s1768 = scalar_lea.hbm %s3, %s1767
          %s1769 = sshll.u32 %s1757, 4
          %s1770 = int_to_ptr.vmem [resolvable:$true] %s1769
          %1775 = dma.vmem_to_hbm [thread:$0]  %s1770, 2048, %s1768, %s1754, 128, 128, 8
        $region51: #{tpu_custom_call.1} parent=31 // pred_fallthru
          _
      $region32: #{tpu_custom_call.1} parent=5 // pred_fallthru
        _
      %p1776 = scmp.le.s32.totalorder 2, %s16
      // Predicated region
      $region52: #{tpu_custom_call.1} parent=5 // pred_check
        %p1777 = pneg %p1776
      $region53: #{tpu_custom_call.1} parent=5 // pred_check_branch
        %1779 = sbr.rel (%p1777) target = $region55
      $region54: #{tpu_custom_call.1} parent=5 // pred_region
        %s1780 = ssub.s32 %s16, 2
        // Predicated region
        $region56: #{tpu_custom_call.1} parent=54 // pred_check
          %p1781 = pneg %p129
        $region57: #{tpu_custom_call.1} parent=54 // pred_check_branch
          %1783 = sbr.rel (%p1781) target = $region59
        $region58: #{tpu_custom_call.1} parent=54 // pred_region
          %s1784 = sand.u32 %s114, 1
          %s1785 = scalar_lea.sflag [#allocation6], %s1784
          %s1786 = sand.u32 %s114, 1
          %s1787 = smul.addr %s1786, 128
          %s1788 = scalar_lea.vmem [#allocation9], %s1787
          %1789 = dma.done %s1785, 2048
        $region59: #{tpu_custom_call.1} parent=54 // pred_fallthru
          _
      $region55: #{tpu_custom_call.1} parent=5 // pred_fallthru
        _
    $region6: #{tpu_custom_call.1} parent=1 // loop_footer
      %s20 = sadd.s32 1, %s16
    $region7: #{tpu_custom_call.1} parent=1 // loop_footer_branch
      %15 = sbr.rel target = $region3
    $region8: #{tpu_custom_call.1} parent=1 // loop_exit
      _
    %1790 = vsyncpa [#allocation5], 1
    %s1791 = scalar_lea.sflag [#allocation5], 1
    %1792 = vsyncpa %s1791, 1
    %1793 = vsyncpa [#allocation8], 1
    %1794 = vsyncpa [#allocation6], 1
    %s1795 = scalar_lea.sflag [#allocation6], 1
    %1796 = vsyncpa %s1795, 1

</llo_original>
